<compile_context>
chip_gen: v7x
topology: tpu7x:2x2x1
jax: 0.10.0
libtpu: 0.0.40
codegen_flags: <defaults>
</compile_context>

<pallas_src>
import jax
import jax.numpy as jnp
from jax import lax
from jax.experimental import pallas as pl
from jax.experimental.pallas import tpu as pltpu

IN_DIM = 28 * 28
H1_DIM = 30
H2_DIM = 20
OUT_DIM = 10
LANES = 128  # lane-dense padded output width


def mlp_kernel(x_ref, w1_ref, b1_ref, w2_ref, b2_ref, w3_ref, b3_ref, o_ref):
    # Contract the last axis of x with the last axis of W (W is (out, in)),
    # i.e. x @ W.T — identical math to PyTorch nn.Linear.
    dims = (((1,), (1,)), ((), ()))

    # fc1 + ReLU (bf16 MXU inputs, f32 accumulation, f32 elementwise)
    h1 = lax.dot_general(x_ref[...], w1_ref[...], dims,
                         preferred_element_type=jnp.float32)
    h1 = jnp.maximum(h1 + b1_ref[...], 0.0)

    # fc2 + ReLU
    h2 = lax.dot_general(h1.astype(jnp.bfloat16), w2_ref[...], dims,
                         preferred_element_type=jnp.float32)
    h2 = jnp.maximum(h2 + b2_ref[...], 0.0)

    # fc3 (output padded to 128 lanes for an unmasked, lane-dense store)
    out = lax.dot_general(h2.astype(jnp.bfloat16), w3_ref[...], dims,
                          preferred_element_type=jnp.float32)
    o_ref[...] = (out + b3_ref[...]).astype(o_ref.dtype)


def mlp_forward(x, w1, b1, w2, b2, w3, b3, *, tile_b=128):
    """x: (B, 784) f32. Weights in PyTorch (out, in) layout, biases (out,)."""
    batch = x.shape[0]

    # --- dtype / layout plumbing (outside the kernel, done once) ---
    x_bf = x.astype(jnp.bfloat16)
    w1_bf = w1.astype(jnp.bfloat16)                       # (30, 784) lane-dense
    w2_bf = w2.astype(jnp.bfloat16)                       # (20, 30)
    # Pad fc3 to 128 output columns -> lane-dense output slab.
    w3_pad = jnp.zeros((LANES, w3.shape[1]), jnp.bfloat16).at[:OUT_DIM].set(
        w3.astype(jnp.bfloat16))                          # (128, 20)
    b1_2d = b1.reshape(1, -1).astype(jnp.float32)         # (1, 30)
    b2_2d = b2.reshape(1, -1).astype(jnp.float32)         # (1, 20)
    b3_pad = jnp.zeros((1, LANES), jnp.float32).at[:, :OUT_DIM].set(
        b3.reshape(1, -1).astype(jnp.float32))            # (1, 128)

    # Pad batch up to a multiple of the batch tile.
    n_tiles = (batch + tile_b - 1) // tile_b
    padded_b = n_tiles * tile_b
    if padded_b != batch:
        x_bf = jnp.pad(x_bf, ((0, padded_b - batch), (0, 0)))

    # Constant index_map -> weights/biases stay VMEM-resident across steps.
    const = lambda a: pl.BlockSpec(a.shape, lambda i: (0,) * a.ndim)

    flops = 2 * padded_b * (IN_DIM * H1_DIM + H1_DIM * H2_DIM + H2_DIM * LANES)
    bytes_accessed = (
        x_bf.size * 2                                    # bf16 input
        + (w1_bf.size + w2_bf.size + w3_pad.size) * 2    # bf16 weights
        + (b1_2d.size + b2_2d.size + b3_pad.size) * 4    # f32 biases
        + padded_b * LANES * 4                           # f32 output slab
    )

    out_padded = pl.pallas_call(
        mlp_kernel,
        out_shape=jax.ShapeDtypeStruct((padded_b, LANES), jnp.float32),
        grid=(n_tiles,),
        in_specs=[
            pl.BlockSpec((tile_b, IN_DIM), lambda i: (i, 0)),  # x: batch-tiled
            const(w1_bf), const(b1_2d),
            const(w2_bf), const(b2_2d),
            const(w3_pad), const(b3_pad),
        ],
        out_specs=pl.BlockSpec((tile_b, LANES), lambda i: (i, 0)),
        compiler_params=pltpu.CompilerParams(
            dimension_semantics=("parallel",)),            # both v7x TCs
        cost_estimate=pl.CostEstimate(
            flops=flops, transcendentals=0, bytes_accessed=bytes_accessed),
    )(x_bf, w1_bf, b1_2d, w2_bf, b2_2d, w3_pad, b3_pad)

    return out_padded[:batch, :OUT_DIM]


def init_linear(key, fan_in, fan_out):
    # PyTorch nn.Linear default init: U(-1/sqrt(fan_in), 1/sqrt(fan_in)),
    # weight stored in PyTorch's (out, in) layout.
    kw, kb = jax.random.split(key)
    bound = 1.0 / jnp.sqrt(fan_in)
    w = jax.random.uniform(kw, (fan_out, fan_in), jnp.float32, -bound, bound)
    b = jax.random.uniform(kb, (fan_out,), jnp.float32, -bound, bound)
    return w, b


if __name__ == "__main__":
    key = jax.random.PRNGKey(0)
    k_x, k1, k2, k3 = jax.random.split(key, 4)

    batch = 256  # exercises the batch grid (2 tiles of 128)
    x = jax.random.normal(k_x, (batch, IN_DIM), jnp.float32)

    w1, b1 = init_linear(k1, IN_DIM, H1_DIM)
    w2, b2 = init_linear(k2, H1_DIM, H2_DIM)
    w3, b3 = init_linear(k3, H2_DIM, OUT_DIM)

    out = mlp_forward(x, w1, b1, w2, b2, w3, b3)
    out = jax.block_until_ready(out)
    assert out.shape == (batch, OUT_DIM)

    # Reference with the same bf16-input / f32-accumulation math as the kernel.
    xb = x.astype(jnp.bfloat16)
    h1 = jnp.maximum(
        jnp.dot(xb, w1.astype(jnp.bfloat16).T,
                preferred_element_type=jnp.float32) + b1, 0.0)
    h2 = jnp.maximum(
        jnp.dot(h1.astype(jnp.bfloat16), w2.astype(jnp.bfloat16).T,
                preferred_element_type=jnp.float32) + b2, 0.0)
    ref = jnp.dot(h2.astype(jnp.bfloat16), w3.astype(jnp.bfloat16).T,
                  preferred_element_type=jnp.float32) + b3
    assert jnp.allclose(out, ref, atol=1e-3, rtol=1e-3)

    # Sanity vs. full-f32 math (bf16 inputs -> looser tolerance expected).
    h1f = jnp.maximum(x @ w1.T + b1, 0.0)
    h2f = jnp.maximum(h1f @ w2.T + b2, 0.0)
    reff = h2f @ w3.T + b3
    assert jnp.allclose(out, reff, atol=5e-2, rtol=5e-2)

    print("KERNEL_OK")
</pallas_src>

<mosaic_0001>
module attributes {stable_mosaic.version = 11 : i64} {
  func.func @mlp_kernel(%arg0: i32, %arg1: memref<128x784xbf16, #tpu.memory_space<vmem>>, %arg2: memref<30x784xbf16, #tpu.memory_space<vmem>>, %arg3: memref<1x30xf32, #tpu.memory_space<vmem>>, %arg4: memref<20x30xbf16, #tpu.memory_space<vmem>>, %arg5: memref<1x20xf32, #tpu.memory_space<vmem>>, %arg6: memref<128x20xbf16, #tpu.memory_space<vmem>>, %arg7: memref<1x128xf32, #tpu.memory_space<vmem>>, %arg8: memref<128x128xf32, #tpu.memory_space<vmem>>) attributes {dimension_semantics = [#tpu.dimension_semantics<parallel>], iteration_bounds = array<i64: 2>, scalar_prefetch = 0 : i64, scratch_operands = 0 : i64, tpu.core_type = #tpu.core_type<tc>, window_params = [{transform_indices = @transform_0, window_bounds = array<i64: 128, 784>}, {pipeline_mode = #tpu.pipeline_mode<synchronous>, transform_indices = @transform_1, window_bounds = array<i64: 30, 784>}, {pipeline_mode = #tpu.pipeline_mode<synchronous>, transform_indices = @transform_2, window_bounds = array<i64: 1, 30>}, {pipeline_mode = #tpu.pipeline_mode<synchronous>, transform_indices = @transform_3, window_bounds = array<i64: 20, 30>}, {pipeline_mode = #tpu.pipeline_mode<synchronous>, transform_indices = @transform_4, window_bounds = array<i64: 1, 20>}, {pipeline_mode = #tpu.pipeline_mode<synchronous>, transform_indices = @transform_5, window_bounds = array<i64: 128, 20>}, {pipeline_mode = #tpu.pipeline_mode<synchronous>, transform_indices = @transform_6, window_bounds = array<i64: 1, 128>}, {transform_indices = @transform_7, window_bounds = array<i64: 128, 128>}]} {
    %c0 = arith.constant 0 : index
    %c0_0 = arith.constant 0 : index
    %0 = vector.load %arg1[%c0, %c0_0] : memref<128x784xbf16, #tpu.memory_space<vmem>>, vector<128x784xbf16>
    %c0_1 = arith.constant 0 : index
    %c0_2 = arith.constant 0 : index
    %1 = vector.load %arg2[%c0_1, %c0_2] : memref<30x784xbf16, #tpu.memory_space<vmem>>, vector<30x784xbf16>
    %cst = arith.constant dense<0.000000e+00> : vector<128x30xf32>
    %2 = tpu.matmul %0, %1, %cst {dimension_numbers = #tpu.dot_dimension_numbers<[1], [1], [0], [0], [0, 0, 1, 0], [], []>} : vector<128x784xbf16>, vector<30x784xbf16>, vector<128x30xf32> -> vector<128x30xf32>
    %c0_3 = arith.constant 0 : index
    %c0_4 = arith.constant 0 : index
    %3 = vector.load %arg3[%c0_3, %c0_4] : memref<1x30xf32, #tpu.memory_space<vmem>>, vector<1x30xf32>
    %4 = vector.broadcast %3 : vector<1x30xf32> to vector<128x30xf32>
    %5 = arith.addf %2, %4 : vector<128x30xf32>
    %cst_5 = arith.constant 0.000000e+00 : f32
    %6 = vector.broadcast %cst_5 : f32 to vector<128x30xf32>
    %7 = arith.maximumf %5, %6 : vector<128x30xf32>
    %8 = arith.truncf %7 : vector<128x30xf32> to vector<128x30xbf16>
    %c0_6 = arith.constant 0 : index
    %c0_7 = arith.constant 0 : index
    %9 = vector.load %arg4[%c0_6, %c0_7] : memref<20x30xbf16, #tpu.memory_space<vmem>>, vector<20x30xbf16>
    %cst_8 = arith.constant dense<0.000000e+00> : vector<128x20xf32>
    %10 = tpu.matmul %8, %9, %cst_8 {dimension_numbers = #tpu.dot_dimension_numbers<[1], [1], [0], [0], [0, 0, 1, 0], [], []>} : vector<128x30xbf16>, vector<20x30xbf16>, vector<128x20xf32> -> vector<128x20xf32>
    %c0_9 = arith.constant 0 : index
    %c0_10 = arith.constant 0 : index
    %11 = vector.load %arg5[%c0_9, %c0_10] : memref<1x20xf32, #tpu.memory_space<vmem>>, vector<1x20xf32>
    %12 = vector.broadcast %11 : vector<1x20xf32> to vector<128x20xf32>
    %13 = arith.addf %10, %12 : vector<128x20xf32>
    %cst_11 = arith.constant 0.000000e+00 : f32
    %14 = vector.broadcast %cst_11 : f32 to vector<128x20xf32>
    %15 = arith.maximumf %13, %14 : vector<128x20xf32>
    %16 = arith.truncf %15 : vector<128x20xf32> to vector<128x20xbf16>
    %c0_12 = arith.constant 0 : index
    %c0_13 = arith.constant 0 : index
    %17 = vector.load %arg6[%c0_12, %c0_13] : memref<128x20xbf16, #tpu.memory_space<vmem>>, vector<128x20xbf16>
    %cst_14 = arith.constant dense<0.000000e+00> : vector<128x128xf32>
    %18 = tpu.matmul %16, %17, %cst_14 {dimension_numbers = #tpu.dot_dimension_numbers<[1], [1], [0], [0], [0, 0, 1, 0], [], []>} : vector<128x20xbf16>, vector<128x20xbf16>, vector<128x128xf32> -> vector<128x128xf32>
    %c0_15 = arith.constant 0 : index
    %c0_16 = arith.constant 0 : index
    %19 = vector.load %arg7[%c0_15, %c0_16] : memref<1x128xf32, #tpu.memory_space<vmem>>, vector<1x128xf32>
    %20 = vector.broadcast %19 : vector<1x128xf32> to vector<128x128xf32>
    %21 = arith.addf %18, %20 : vector<128x128xf32>
    %c0_17 = arith.constant 0 : index
    %c0_18 = arith.constant 0 : index
    %22 = vector.load %arg8[%c0_17, %c0_18] : memref<128x128xf32, #tpu.memory_space<vmem>>, vector<128x128xf32>
    tpu.vector_store %arg8[%c0_17, %c0_18], %21 {strides = array<i32>} : memref<128x128xf32, #tpu.memory_space<vmem>>, vector<128x128xf32>,
    return
  }
  func.func @transform_0(%arg0: i32) -> (i32, i32) {
    %c0_i32 = arith.constant 0 : i32
    %c0_i32_0 = arith.constant 0 : i32
    return %arg0, %c0_i32 : i32, i32
  }
  func.func @transform_1(%arg0: i32) -> (i32, i32) {
    %c0_i32 = arith.constant 0 : i32
    %c0_i32_0 = arith.constant 0 : i32
    %c0_i32_1 = arith.constant 0 : i32
    return %c0_i32, %c0_i32_0 : i32, i32
  }
  func.func @transform_2(%arg0: i32) -> (i32, i32) {
    %c0_i32 = arith.constant 0 : i32
    %c0_i32_0 = arith.constant 0 : i32
    %c0_i32_1 = arith.constant 0 : i32
    return %c0_i32, %c0_i32_0 : i32, i32
  }
  func.func @transform_3(%arg0: i32) -> (i32, i32) {
    %c0_i32 = arith.constant 0 : i32
    %c0_i32_0 = arith.constant 0 : i32
    %c0_i32_1 = arith.constant 0 : i32
    return %c0_i32, %c0_i32_0 : i32, i32
  }
  func.func @transform_4(%arg0: i32) -> (i32, i32) {
    %c0_i32 = arith.constant 0 : i32
    %c0_i32_0 = arith.constant 0 : i32
    %c0_i32_1 = arith.constant 0 : i32
    return %c0_i32, %c0_i32_0 : i32, i32
  }
  func.func @transform_5(%arg0: i32) -> (i32, i32) {
    %c0_i32 = arith.constant 0 : i32
    %c0_i32_0 = arith.constant 0 : i32
    %c0_i32_1 = arith.constant 0 : i32
    return %c0_i32, %c0_i32_0 : i32, i32
  }
  func.func @transform_6(%arg0: i32) -> (i32, i32) {
    %c0_i32 = arith.constant 0 : i32
    %c0_i32_0 = arith.constant 0 : i32
    %c0_i32_1 = arith.constant 0 : i32
    return %c0_i32, %c0_i32_0 : i32, i32
  }
  func.func @transform_7(%arg0: i32) -> (i32, i32) {
    %c0_i32 = arith.constant 0 : i32
    %c0_i32_0 = arith.constant 0 : i32
    return %arg0, %c0_i32 : i32, i32
  }
}

</mosaic_0001>

<llo_original>
// kernel: tpu_custom_call.1
$region0: #{tpu_custom_call.1}
  #allocation0 [shape = 'u32[]', space=smem, size = 0x4, offset = 0x4, fixed_abs, tag = 'smem constant byte address 0x4 - core index']
  #allocation1 [shape = 'u32[144,128]{1,0:T(1,128)}', space=vmem, size = 0x12000, scoped, tag = 'internal scratch']
  %s0 = inlined_call_operand.vmem [shape: bf16[256,784], index: 0, kind: input, shape index: {}]
  %s1 = inlined_call_operand.vmem [shape: bf16[30,784], index: 1, kind: input, shape index: {}]
  %s2 = inlined_call_operand.vmem [shape: f32[1,30], index: 2, kind: input, shape index: {}]
  %s3 = inlined_call_operand.vmem [shape: bf16[20,30], index: 3, kind: input, shape index: {}]
  %s4 = inlined_call_operand.vmem [shape: f32[1,20], index: 4, kind: input, shape index: {}]
  %s5 = inlined_call_operand.vmem [shape: bf16[128,20], index: 5, kind: input, shape index: {}]
  %s6 = inlined_call_operand.vmem [shape: f32[1,128], index: 6, kind: input, shape index: {}]
  %s7 = inlined_call_operand.hbm [shape: f32[256,128], index: 7, kind: output, shape index: {}]
  %s8 = sld [smem:[#allocation0]]
  $region61: #{tpu_custom_call.1} parent=0
    _
  %s10 = ssub.s32 1, %s8
  %s11 = scalar_select 0, %s10, %s8
  $region1: #{tpu_custom_call.1} parent=0
    #allocation2 [shape = 'u8[131072]{0}', space=vmem, size = 0x20000, scoped, tag = 'output window, operand 0']
    #allocation3 [shape = 's32[2]{0}', space=sflag, size = 0x8, scoped, tag = 'scoped memory for tpu_custom_call.1']
    %12 = vsyncpa [#allocation3], 0
    %s13 = scalar_lea.sflag [#allocation3], 1
    %14 = vsyncpa %s13, 0
    loop: start=0, step=1, limit=4
    $region2: #{tpu_custom_call.1} parent=1 // loop_pre_header
      _
    $region3: #{tpu_custom_call.1} parent=1 // loop_header
      %s16 = sphi 0, %s20
      %p17 = scmp.ge.s32.totalorder %s16, 4
      %s26 = sphi 0, %s28
      %s29 = sphi 0, %s26
      %s30 = sphi 0, %s29
      %s46 = sphi 0, %s30
      %s50 = sphi 0, %s50
      %s52 = sphi 0, %s50
      %s53 = sphi 0, %s52
      %s67 = sphi 0, %s53
      %s71 = sphi 0, %s71
      %s73 = sphi 0, %s71
      %s74 = sphi 0, %s73
      %s88 = sphi 0, %s74
      %s92 = sphi 0, %s92
      %s94 = sphi 0, %s92
      %s95 = sphi 0, %s94
      %s109 = sphi 0, %s95
      %s113 = sphi 0, %s113
      %s115 = sphi 0, %s113
      %s116 = sphi 0, %s115
      %s130 = sphi 0, %s116
      %s134 = sphi 0, %s134
      %s136 = sphi 0, %s134
      %s137 = sphi 0, %s136
      %s151 = sphi 0, %s137
      %s155 = sphi 0, %s155
      %s157 = sphi 0, %s155
      %s158 = sphi 0, %s157
      %s172 = sphi 0, %s158
      %s178 = sphi 0, %s180
      %s181 = sphi 0, %s178
      %s182 = sphi 0, %s181
      %s198 = sphi 0, %s182
    $region4: #{tpu_custom_call.1} parent=1 // loop_header_branch
      %19 = sbr.rel (%p17) target = $region8
    $region5: #{tpu_custom_call.1} parent=1 // loop_body
      %s21 = ssub.s32 %s16, 1
      %s22 = ssub.s32 %s16, 2
      %s23 = sadd.s32 %s16, 1
      %s24 = ssub.s32 %s16, %s23
      %p25 = scmp.eq.s32.totalorder %s24, 0
      %s27 = sadd.s32 %s26, 1
      %s28 = scalar_select %p25, %s26, %s27
      %p31 = pneg %p25
      %p32 = scmp.eq.s32.totalorder %s16, 1
      %p33 = por %p31, %p32
      %p34 = scmp.ne.s32.totalorder %s26, %s29
      %p35 = scmp.eq.s32.totalorder %s16, 0
      %p36 = por %p34, %p35
      %p37 = scmp.ne.s32.totalorder %s26, %s29
      %p38 = scmp.eq.s32.totalorder %s21, 1
      %p39 = por %p37, %p38
      %p40 = scmp.ne.s32.totalorder %s29, %s30
      %p41 = scmp.eq.s32.totalorder %s21, 0
      %p42 = por %p40, %p41
      %p43 = scmp.ne.s32.totalorder %s29, %s30
      %p44 = scmp.eq.s32.totalorder %s22, 1
      %p45 = por %p43, %p44
      %p47 = scmp.ne.s32.totalorder %s30, %s46
      %p48 = scmp.eq.s32.totalorder %s22, 0
      %p49 = por %p47, %p48
      %s51 = sadd.s32 %s50, 1
      %p54 = scmp.eq.s32.totalorder %s16, 1
      %p55 = scmp.ne.s32.totalorder %s50, %s52
      %p56 = scmp.eq.s32.totalorder %s16, 0
      %p57 = por %p55, %p56
      %p58 = scmp.ne.s32.totalorder %s50, %s52
      %p59 = scmp.eq.s32.totalorder %s21, 1
      %p60 = por %p58, %p59
      %p61 = scmp.ne.s32.totalorder %s52, %s53
      %p62 = scmp.eq.s32.totalorder %s21, 0
      %p63 = por %p61, %p62
      %p64 = scmp.ne.s32.totalorder %s52, %s53
      %p65 = scmp.eq.s32.totalorder %s22, 1
      %p66 = por %p64, %p65
      %p68 = scmp.ne.s32.totalorder %s53, %s67
      %p69 = scmp.eq.s32.totalorder %s22, 0
      %p70 = por %p68, %p69
      %s72 = sadd.s32 %s71, 1
      %p75 = scmp.eq.s32.totalorder %s16, 1
      %p76 = scmp.ne.s32.totalorder %s71, %s73
      %p77 = scmp.eq.s32.totalorder %s16, 0
      %p78 = por %p76, %p77
      %p79 = scmp.ne.s32.totalorder %s71, %s73
      %p80 = scmp.eq.s32.totalorder %s21, 1
      %p81 = por %p79, %p80
      %p82 = scmp.ne.s32.totalorder %s73, %s74
      %p83 = scmp.eq.s32.totalorder %s21, 0
      %p84 = por %p82, %p83
      %p85 = scmp.ne.s32.totalorder %s73, %s74
      %p86 = scmp.eq.s32.totalorder %s22, 1
      %p87 = por %p85, %p86
      %p89 = scmp.ne.s32.totalorder %s74, %s88
      %p90 = scmp.eq.s32.totalorder %s22, 0
      %p91 = por %p89, %p90
      %s93 = sadd.s32 %s92, 1
      %p96 = scmp.eq.s32.totalorder %s16, 1
      %p97 = scmp.ne.s32.totalorder %s92, %s94
      %p98 = scmp.eq.s32.totalorder %s16, 0
      %p99 = por %p97, %p98
      %p100 = scmp.ne.s32.totalorder %s92, %s94
      %p101 = scmp.eq.s32.totalorder %s21, 1
      %p102 = por %p100, %p101
      %p103 = scmp.ne.s32.totalorder %s94, %s95
      %p104 = scmp.eq.s32.totalorder %s21, 0
      %p105 = por %p103, %p104
      %p106 = scmp.ne.s32.totalorder %s94, %s95
      %p107 = scmp.eq.s32.totalorder %s22, 1
      %p108 = por %p106, %p107
      %p110 = scmp.ne.s32.totalorder %s95, %s109
      %p111 = scmp.eq.s32.totalorder %s22, 0
      %p112 = por %p110, %p111
      %s114 = sadd.s32 %s113, 1
      %p117 = scmp.eq.s32.totalorder %s16, 1
      %p118 = scmp.ne.s32.totalorder %s113, %s115
      %p119 = scmp.eq.s32.totalorder %s16, 0
      %p120 = por %p118, %p119
      %p121 = scmp.ne.s32.totalorder %s113, %s115
      %p122 = scmp.eq.s32.totalorder %s21, 1
      %p123 = por %p121, %p122
      %p124 = scmp.ne.s32.totalorder %s115, %s116
      %p125 = scmp.eq.s32.totalorder %s21, 0
      %p126 = por %p124, %p125
      %p127 = scmp.ne.s32.totalorder %s115, %s116
      %p128 = scmp.eq.s32.totalorder %s22, 1
      %p129 = por %p127, %p128
      %p131 = scmp.ne.s32.totalorder %s116, %s130
      %p132 = scmp.eq.s32.totalorder %s22, 0
      %p133 = por %p131, %p132
      %s135 = sadd.s32 %s134, 1
      %p138 = scmp.eq.s32.totalorder %s16, 1
      %p139 = scmp.ne.s32.totalorder %s134, %s136
      %p140 = scmp.eq.s32.totalorder %s16, 0
      %p141 = por %p139, %p140
      %p142 = scmp.ne.s32.totalorder %s134, %s136
      %p143 = scmp.eq.s32.totalorder %s21, 1
      %p144 = por %p142, %p143
      %p145 = scmp.ne.s32.totalorder %s136, %s137
      %p146 = scmp.eq.s32.totalorder %s21, 0
      %p147 = por %p145, %p146
      %p148 = scmp.ne.s32.totalorder %s136, %s137
      %p149 = scmp.eq.s32.totalorder %s22, 1
      %p150 = por %p148, %p149
      %p152 = scmp.ne.s32.totalorder %s137, %s151
      %p153 = scmp.eq.s32.totalorder %s22, 0
      %p154 = por %p152, %p153
      %s156 = sadd.s32 %s155, 1
      %p159 = scmp.eq.s32.totalorder %s16, 1
      %p160 = scmp.ne.s32.totalorder %s155, %s157
      %p161 = scmp.eq.s32.totalorder %s16, 0
      %p162 = por %p160, %p161
      %p163 = scmp.ne.s32.totalorder %s155, %s157
      %p164 = scmp.eq.s32.totalorder %s21, 1
      %p165 = por %p163, %p164
      %p166 = scmp.ne.s32.totalorder %s157, %s158
      %p167 = scmp.eq.s32.totalorder %s21, 0
      %p168 = por %p166, %p167
      %p169 = scmp.ne.s32.totalorder %s157, %s158
      %p170 = scmp.eq.s32.totalorder %s22, 1
      %p171 = por %p169, %p170
      %p173 = scmp.ne.s32.totalorder %s158, %s172
      %p174 = scmp.eq.s32.totalorder %s22, 0
      %p175 = por %p173, %p174
      %s176 = ssub.s32 %s16, %s23
      %p177 = scmp.eq.s32.totalorder %s176, 0
      %s179 = sadd.s32 %s178, 1
      %s180 = scalar_select %p177, %s178, %s179
      %p183 = pneg %p177
      %p184 = scmp.eq.s32.totalorder %s16, 1
      %p185 = por %p183, %p184
      %p186 = scmp.ne.s32.totalorder %s178, %s181
      %p187 = scmp.eq.s32.totalorder %s16, 0
      %p188 = por %p186, %p187
      %p189 = scmp.ne.s32.totalorder %s178, %s181
      %p190 = scmp.eq.s32.totalorder %s21, 1
      %p191 = por %p189, %p190
      %p192 = scmp.ne.s32.totalorder %s181, %s182
      %p193 = scmp.eq.s32.totalorder %s21, 0
      %p194 = por %p192, %p193
      %p195 = scmp.ne.s32.totalorder %s181, %s182
      %p196 = scmp.eq.s32.totalorder %s22, 1
      %p197 = por %p195, %p196
      %p199 = scmp.ne.s32.totalorder %s182, %s198
      %p200 = scmp.eq.s32.totalorder %s22, 0
      %p201 = por %p199, %p200
      %p202 = scmp.le.s32.totalorder 1, %s16
      %p203 = scmp.lt.s32.totalorder %s16, 3
      %p204 = pnand %p202, %p203
      %p205 = pneg %p204
      // Predicated region
      $region9: #{tpu_custom_call.1} parent=5 // pred_check
        _
      $region10: #{tpu_custom_call.1} parent=5 // pred_check_branch
        %207 = sbr.rel (%p204) target = $region12
      $region11: #{tpu_custom_call.1} parent=5 // pred_region
        %s208 = ssub.s32 %s16, 1
        // Predicated region
        $region13: #{tpu_custom_call.1} parent=11 // pred_check
          %p209 = pneg %p63
        $region14: #{tpu_custom_call.1} parent=11 // pred_check_branch
          %211 = sbr.rel (%p209) target = $region16
        $region15: #{tpu_custom_call.1} parent=11 // pred_region
          _
        $region16: #{tpu_custom_call.1} parent=11 // pred_fallthru
          _
        // Predicated region
        $region17: #{tpu_custom_call.1} parent=11 // pred_check
          %p212 = pneg %p84
        $region18: #{tpu_custom_call.1} parent=11 // pred_check_branch
          %214 = sbr.rel (%p212) target = $region20
        $region19: #{tpu_custom_call.1} parent=11 // pred_region
          _
        $region20: #{tpu_custom_call.1} parent=11 // pred_fallthru
          _
        // Predicated region
        $region21: #{tpu_custom_call.1} parent=11 // pred_check
          %p215 = pneg %p105
        $region22: #{tpu_custom_call.1} parent=11 // pred_check_branch
          %217 = sbr.rel (%p215) target = $region24
        $region23: #{tpu_custom_call.1} parent=11 // pred_region
          _
        $region24: #{tpu_custom_call.1} parent=11 // pred_fallthru
          _
        // Predicated region
        $region25: #{tpu_custom_call.1} parent=11 // pred_check
          %p218 = pneg %p126
        $region26: #{tpu_custom_call.1} parent=11 // pred_check_branch
          %220 = sbr.rel (%p218) target = $region28
        $region27: #{tpu_custom_call.1} parent=11 // pred_region
          _
        $region28: #{tpu_custom_call.1} parent=11 // pred_fallthru
          _
        // Predicated region
        $region29: #{tpu_custom_call.1} parent=11 // pred_check
          %p221 = pneg %p147
        $region30: #{tpu_custom_call.1} parent=11 // pred_check_branch
          %223 = sbr.rel (%p221) target = $region32
        $region31: #{tpu_custom_call.1} parent=11 // pred_region
          _
        $region32: #{tpu_custom_call.1} parent=11 // pred_fallthru
          _
        // Predicated region
        $region33: #{tpu_custom_call.1} parent=11 // pred_check
          %p224 = pneg %p168
        $region34: #{tpu_custom_call.1} parent=11 // pred_check_branch
          %226 = sbr.rel (%p224) target = $region36
        $region35: #{tpu_custom_call.1} parent=11 // pred_region
          _
        $region36: #{tpu_custom_call.1} parent=11 // pred_fallthru
          _
      $region12: #{tpu_custom_call.1} parent=5 // pred_fallthru
        _
      %p227 = scmp.lt.s32.totalorder %s16, 2
      // Predicated region
      $region37: #{tpu_custom_call.1} parent=5 // pred_check
        %p228 = pneg %p227
      $region38: #{tpu_custom_call.1} parent=5 // pred_check_branch
        %230 = sbr.rel (%p228) target = $region40
      $region39: #{tpu_custom_call.1} parent=5 // pred_region
        // Predicated region
        $region41: #{tpu_custom_call.1} parent=39 // pred_check
          %p231 = pneg %p36
        $region42: #{tpu_custom_call.1} parent=39 // pred_check_branch
          %233 = sbr.rel (%p231) target = $region44
        $region43: #{tpu_custom_call.1} parent=39 // pred_region
          %s234 = smul.u32 16, %s16
          %p235 = scmp.lt.s32.totalorder %s234, 31
          %s236 = scalar_select %p235, %s234, 31
          %s237 = smul.addr %s236, 7
          %s238 = smul.addr %s237, 4
          %s239 = scalar_lea.vmem %s0, %s238
          %s240 = smul.u32 16, %s16
        $region44: #{tpu_custom_call.1} parent=39 // pred_fallthru
          _
      $region40: #{tpu_custom_call.1} parent=5 // pred_fallthru
        _
      %p241 = scmp.le.s32.totalorder 1, %s16
      %p242 = scmp.lt.s32.totalorder %s16, 3
      %p243 = pnand %p241, %p242
      %p244 = pneg %p243
      // Predicated region
      $region45: #{tpu_custom_call.1} parent=5 // pred_check
        _
      $region46: #{tpu_custom_call.1} parent=5 // pred_check_branch
        %246 = sbr.rel (%p243) target = $region48
      $region47: #{tpu_custom_call.1} parent=5 // pred_region
        %s247 = ssub.s32 %s16, 1
        %s248 = smul.u32 16, %s21
        %p249 = scmp.lt.s32.totalorder %s248, 31
        %s250 = scalar_select %p249, %s248, 31
        %s251 = smul.addr %s250, 7
        %s252 = smul.addr %s251, 4
        %s253 = scalar_lea.vmem %s0, %s252
        %p254 = pneg %p42
        %p255 = pneg %p39
        %p256 = pneg %p63
        %p257 = pneg %p60
        %p258 = pneg %p84
        %p259 = pneg %p81
        %p260 = pneg %p105
        %p261 = pneg %p102
        %p262 = pneg %p126
        %p263 = pneg %p123
        %p264 = pneg %p147
        %p265 = pneg %p144
        %p266 = pneg %p168
        %p267 = pneg %p165
        %p268 = pneg %p194
        %p269 = pneg %p191
        %s270 = sand.u32 %s181, 1
        %s271 = scalar_lea.sflag [#allocation3], %s270
        %s272 = sand.u32 %s181, 1
        %s273 = smul.addr %s272, 128
        %s274 = scalar_lea.vmem [#allocation2], %s273
        %s275 = smul.u32 16, %s21
        %p276 = scmp.lt.s32.totalorder %s275, 31
        %s277 = scalar_select %p276, %s275, 31
        %s278 = smul.addr %s277, 7
        %s279 = smul.addr %s278, 4
        %s280 = scalar_lea.vmem %s0, %s279
        %s281 = smul.u32 16, %s21
        %s282 = smul.u32 16, %s21
        %v284 = vld [vmem:[%s280] sm:$0xff]
        %v285 = vld [vmem:[%s280 + $0x8] sm:$0xff]
        %v286 = vld [vmem:[%s280 + $0x10] sm:$0xff]
        %v287 = vld [vmem:[%s280 + $0x18] sm:$0xf]
        %v288 = vld [vmem:[%s280 + $0x1c] sm:$0xff]
        %v289 = vld [vmem:[%s280 + $0x24] sm:$0xff]
        %v290 = vld [vmem:[%s280 + $0x2c] sm:$0xff]
        %v291 = vld [vmem:[%s280 + $0x34] sm:$0xf]
        %v292 = vld [vmem:[%s280 + $0x38] sm:$0xff]
        %v293 = vld [vmem:[%s280 + $0x40] sm:$0xff]
        %v294 = vld [vmem:[%s280 + $0x48] sm:$0xff]
        %v295 = vld [vmem:[%s280 + $0x50] sm:$0xf]
        %v296 = vld [vmem:[%s280 + $0x54] sm:$0xff]
        %v297 = vld [vmem:[%s280 + $0x5c] sm:$0xff]
        %v298 = vld [vmem:[%s280 + $0x64] sm:$0xff]
        %v299 = vld [vmem:[%s280 + $0x6c] sm:$0xf]
        %v300 = vld [vmem:[%s280 + $0x70] sm:$0xff]
        %v301 = vld [vmem:[%s280 + $0x78] sm:$0xff]
        %v302 = vld [vmem:[%s280 + $0x80] sm:$0xff]
        %v303 = vld [vmem:[%s280 + $0x88] sm:$0xf]
        %v304 = vld [vmem:[%s280 + $0x8c] sm:$0xff]
        %v305 = vld [vmem:[%s280 + $0x94] sm:$0xff]
        %v306 = vld [vmem:[%s280 + $0x9c] sm:$0xff]
        %v307 = vld [vmem:[%s280 + $0xa4] sm:$0xf]
        %v308 = vld [vmem:[%s280 + $0xa8] sm:$0xff]
        %v309 = vld [vmem:[%s280 + $0xb0] sm:$0xff]
        %v310 = vld [vmem:[%s280 + $0xb8] sm:$0xff]
        %v311 = vld [vmem:[%s280 + $0xc0] sm:$0xf]
        %v312 = vld [vmem:[%s280 + $0xc4] sm:$0xff]
        %v313 = vld [vmem:[%s280 + $0xcc] sm:$0xff]
        %v314 = vld [vmem:[%s280 + $0xd4] sm:$0xff]
        %v315 = vld [vmem:[%s280 + $0xdc] sm:$0xf]
        %v316 = vld [vmem:[%s280 + $0xe0] sm:$0xff]
        %v317 = vld [vmem:[%s280 + $0xe8] sm:$0xff]
        %v318 = vld [vmem:[%s280 + $0xf0] sm:$0xff]
        %v319 = vld [vmem:[%s280 + $0xf8] sm:$0xf]
        %v320 = vld [vmem:[%s280 + $0xfc] sm:$0xff]
        %v321 = vld [vmem:[%s280 + $0x104] sm:$0xff]
        %v322 = vld [vmem:[%s280 + $0x10c] sm:$0xff]
        %v323 = vld [vmem:[%s280 + $0x114] sm:$0xf]
        %v324 = vld [vmem:[%s280 + $0x118] sm:$0xff]
        %v325 = vld [vmem:[%s280 + $0x120] sm:$0xff]
        %v326 = vld [vmem:[%s280 + $0x128] sm:$0xff]
        %v327 = vld [vmem:[%s280 + $0x130] sm:$0xf]
        %v328 = vld [vmem:[%s280 + $0x134] sm:$0xff]
        %v329 = vld [vmem:[%s280 + $0x13c] sm:$0xff]
        %v330 = vld [vmem:[%s280 + $0x144] sm:$0xff]
        %v331 = vld [vmem:[%s280 + $0x14c] sm:$0xf]
        %v332 = vld [vmem:[%s280 + $0x150] sm:$0xff]
        %v333 = vld [vmem:[%s280 + $0x158] sm:$0xff]
        %v334 = vld [vmem:[%s280 + $0x160] sm:$0xff]
        %v335 = vld [vmem:[%s280 + $0x168] sm:$0xf]
        %v336 = vld [vmem:[%s280 + $0x16c] sm:$0xff]
        %v337 = vld [vmem:[%s280 + $0x174] sm:$0xff]
        %v338 = vld [vmem:[%s280 + $0x17c] sm:$0xff]
        %v339 = vld [vmem:[%s280 + $0x184] sm:$0xf]
        %v340 = vld [vmem:[%s280 + $0x188] sm:$0xff]
        %v341 = vld [vmem:[%s280 + $0x190] sm:$0xff]
        %v342 = vld [vmem:[%s280 + $0x198] sm:$0xff]
        %v343 = vld [vmem:[%s280 + $0x1a0] sm:$0xf]
        %v344 = vld [vmem:[%s280 + $0x1a4] sm:$0xff]
        %v345 = vld [vmem:[%s280 + $0x1ac] sm:$0xff]
        %v346 = vld [vmem:[%s280 + $0x1b4] sm:$0xff]
        %v347 = vld [vmem:[%s280 + $0x1bc] sm:$0xf]
        %v348 = vld [vmem:[%s1] sm:$0xff]
        %v349 = vld [vmem:[%s1 + $0x8] sm:$0xff]
        %v350 = vld [vmem:[%s1 + $0x10] sm:$0xff]
        %v351 = vld [vmem:[%s1 + $0x18] sm:$0xf]
        %v352 = vld [vmem:[%s1 + $0x1c] sm:$0xff]
        %v353 = vld [vmem:[%s1 + $0x24] sm:$0xff]
        %v354 = vld [vmem:[%s1 + $0x2c] sm:$0xff]
        %v355 = vld [vmem:[%s1 + $0x34] sm:$0xf]
        %v356 = vld [vmem:[%s1 + $0x38] sm:$0xff]
        %v357 = vld [vmem:[%s1 + $0x40] sm:$0xff]
        %v358 = vld [vmem:[%s1 + $0x48] sm:$0xff]
        %v359 = vld [vmem:[%s1 + $0x50] sm:$0xf]
        %v360 = vld [vmem:[%s1 + $0x54] sm:$0x77]
        %v361 = vld [vmem:[%s1 + $0x5c] sm:$0x77]
        %v362 = vld [vmem:[%s1 + $0x64] sm:$0x77]
        %v363 = vld [vmem:[%s1 + $0x6c] sm:$0x7]
        %v364 = vld [vmem:[%s2] sm:$0x1]
        %v366 = vlaneseq
        %v367 = vshrl.u32 %v366, 7
        %v368 = vsub.s32 0, %v367
        %v369 = vrot.slane %v364, %v368
        %v435 = vunpack.c.l.b16 %v284
        %v436 = vunpack.c.h.b16 %v284
        %v437 = vunpack.c.l.b16 %v285
        %v438 = vunpack.c.h.b16 %v285
        %v439 = vunpack.c.l.b16 %v286
        %v440 = vunpack.c.h.b16 %v286
        %v441 = vunpack.c.l.b16 %v287
        %v442 = vunpack.c.l.b16 %v288
        %v443 = vunpack.c.h.b16 %v288
        %v444 = vunpack.c.l.b16 %v289
        %v445 = vunpack.c.h.b16 %v289
        %v446 = vunpack.c.l.b16 %v290
        %v447 = vunpack.c.h.b16 %v290
        %v448 = vunpack.c.l.b16 %v291
        %v449 = vunpack.c.l.b16 %v292
        %v450 = vunpack.c.h.b16 %v292
        %v451 = vunpack.c.l.b16 %v293
        %v452 = vunpack.c.h.b16 %v293
        %v453 = vunpack.c.l.b16 %v294
        %v454 = vunpack.c.h.b16 %v294
        %v455 = vunpack.c.l.b16 %v295
        %v456 = vunpack.c.l.b16 %v296
        %v457 = vunpack.c.h.b16 %v296
        %v458 = vunpack.c.l.b16 %v297
        %v459 = vunpack.c.h.b16 %v297
        %v460 = vunpack.c.l.b16 %v298
        %v461 = vunpack.c.h.b16 %v298
        %v462 = vunpack.c.l.b16 %v299
        %v463 = vunpack.c.l.b16 %v300
        %v464 = vunpack.c.h.b16 %v300
        %v465 = vunpack.c.l.b16 %v301
        %v466 = vunpack.c.h.b16 %v301
        %v467 = vunpack.c.l.b16 %v302
        %v468 = vunpack.c.h.b16 %v302
        %v469 = vunpack.c.l.b16 %v303
        %v470 = vunpack.c.l.b16 %v304
        %v471 = vunpack.c.h.b16 %v304
        %v472 = vunpack.c.l.b16 %v305
        %v473 = vunpack.c.h.b16 %v305
        %v474 = vunpack.c.l.b16 %v306
        %v475 = vunpack.c.h.b16 %v306
        %v476 = vunpack.c.l.b16 %v307
        %v477 = vunpack.c.l.b16 %v308
        %v478 = vunpack.c.h.b16 %v308
        %v479 = vunpack.c.l.b16 %v309
        %v480 = vunpack.c.h.b16 %v309
        %v481 = vunpack.c.l.b16 %v310
        %v482 = vunpack.c.h.b16 %v310
        %v483 = vunpack.c.l.b16 %v311
        %v484 = vunpack.c.l.b16 %v312
        %v485 = vunpack.c.h.b16 %v312
        %v486 = vunpack.c.l.b16 %v313
        %v487 = vunpack.c.h.b16 %v313
        %v488 = vunpack.c.l.b16 %v314
        %v489 = vunpack.c.h.b16 %v314
        %v490 = vunpack.c.l.b16 %v315
        %v491 = vunpack.c.l.b16 %v316
        %v492 = vunpack.c.h.b16 %v316
        %v493 = vunpack.c.l.b16 %v317
        %v494 = vunpack.c.h.b16 %v317
        %v495 = vunpack.c.l.b16 %v318
        %v496 = vunpack.c.h.b16 %v318
        %v497 = vunpack.c.l.b16 %v319
        %v498 = vunpack.c.l.b16 %v320
        %v499 = vunpack.c.h.b16 %v320
        %v500 = vunpack.c.l.b16 %v321
        %v501 = vunpack.c.h.b16 %v321
        %v502 = vunpack.c.l.b16 %v322
        %v503 = vunpack.c.h.b16 %v322
        %v504 = vunpack.c.l.b16 %v323
        %v505 = vunpack.c.l.b16 %v324
        %v506 = vunpack.c.h.b16 %v324
        %v507 = vunpack.c.l.b16 %v325
        %v508 = vunpack.c.h.b16 %v325
        %v509 = vunpack.c.l.b16 %v326
        %v510 = vunpack.c.h.b16 %v326
        %v511 = vunpack.c.l.b16 %v327
        %v512 = vunpack.c.l.b16 %v328
        %v513 = vunpack.c.h.b16 %v328
        %v514 = vunpack.c.l.b16 %v329
        %v515 = vunpack.c.h.b16 %v329
        %v516 = vunpack.c.l.b16 %v330
        %v517 = vunpack.c.h.b16 %v330
        %v518 = vunpack.c.l.b16 %v331
        %v519 = vunpack.c.l.b16 %v332
        %v520 = vunpack.c.h.b16 %v332
        %v521 = vunpack.c.l.b16 %v333
        %v522 = vunpack.c.h.b16 %v333
        %v523 = vunpack.c.l.b16 %v334
        %v524 = vunpack.c.h.b16 %v334
        %v525 = vunpack.c.l.b16 %v335
        %v526 = vunpack.c.l.b16 %v336
        %v527 = vunpack.c.h.b16 %v336
        %v528 = vunpack.c.l.b16 %v337
        %v529 = vunpack.c.h.b16 %v337
        %v530 = vunpack.c.l.b16 %v338
        %v531 = vunpack.c.h.b16 %v338
        %v532 = vunpack.c.l.b16 %v339
        %v533 = vunpack.c.l.b16 %v340
        %v534 = vunpack.c.h.b16 %v340
        %v535 = vunpack.c.l.b16 %v341
        %v536 = vunpack.c.h.b16 %v341
        %v537 = vunpack.c.l.b16 %v342
        %v538 = vunpack.c.h.b16 %v342
        %v539 = vunpack.c.l.b16 %v343
        %v540 = vunpack.c.l.b16 %v344
        %v541 = vunpack.c.h.b16 %v344
        %v542 = vunpack.c.l.b16 %v345
        %v543 = vunpack.c.h.b16 %v345
        %v544 = vunpack.c.l.b16 %v346
        %v545 = vunpack.c.h.b16 %v346
        %v546 = vunpack.c.l.b16 %v347
        %v547 = vpack.c.b16 %v442, %v435
        %v548 = vpack.c.b16 %v443, %v436
        %v549 = vpack.c.b16 %v444, %v437
        %v550 = vpack.c.b16 %v445, %v438
        %v551 = vpack.c.b16 %v446, %v439
        %v552 = vpack.c.b16 %v447, %v440
        %v553 = vpack.c.b16 %v448, %v441
        %v554 = vpack.c.b16 %v456, %v449
        %v555 = vpack.c.b16 %v457, %v450
        %v556 = vpack.c.b16 %v458, %v451
        %v557 = vpack.c.b16 %v459, %v452
        %v558 = vpack.c.b16 %v460, %v453
        %v559 = vpack.c.b16 %v461, %v454
        %v560 = vpack.c.b16 %v462, %v455
        %v561 = vpack.c.b16 %v470, %v463
        %v562 = vpack.c.b16 %v471, %v464
        %v563 = vpack.c.b16 %v472, %v465
        %v564 = vpack.c.b16 %v473, %v466
        %v565 = vpack.c.b16 %v474, %v467
        %v566 = vpack.c.b16 %v475, %v468
        %v567 = vpack.c.b16 %v476, %v469
        %v568 = vpack.c.b16 %v484, %v477
        %v569 = vpack.c.b16 %v485, %v478
        %v570 = vpack.c.b16 %v486, %v479
        %v571 = vpack.c.b16 %v487, %v480
        %v572 = vpack.c.b16 %v488, %v481
        %v573 = vpack.c.b16 %v489, %v482
        %v574 = vpack.c.b16 %v490, %v483
        %v575 = vpack.c.b16 %v498, %v491
        %v576 = vpack.c.b16 %v499, %v492
        %v577 = vpack.c.b16 %v500, %v493
        %v578 = vpack.c.b16 %v501, %v494
        %v579 = vpack.c.b16 %v502, %v495
        %v580 = vpack.c.b16 %v503, %v496
        %v581 = vpack.c.b16 %v504, %v497
        %v582 = vpack.c.b16 %v512, %v505
        %v583 = vpack.c.b16 %v513, %v506
        %v584 = vpack.c.b16 %v514, %v507
        %v585 = vpack.c.b16 %v515, %v508
        %v586 = vpack.c.b16 %v516, %v509
        %v587 = vpack.c.b16 %v517, %v510
        %v588 = vpack.c.b16 %v518, %v511
        %v589 = vpack.c.b16 %v526, %v519
        %v590 = vpack.c.b16 %v527, %v520
        %v591 = vpack.c.b16 %v528, %v521
        %v592 = vpack.c.b16 %v529, %v522
        %v593 = vpack.c.b16 %v530, %v523
        %v594 = vpack.c.b16 %v531, %v524
        %v595 = vpack.c.b16 %v532, %v525
        %v596 = vpack.c.b16 %v540, %v533
        %v597 = vpack.c.b16 %v541, %v534
        %v598 = vpack.c.b16 %v542, %v535
        %v599 = vpack.c.b16 %v543, %v536
        %v600 = vpack.c.b16 %v544, %v537
        %v601 = vpack.c.b16 %v545, %v538
        %v602 = vpack.c.b16 %v546, %v539
        %v667 = vunpack.c.l.b16 %v348
        %v668 = vunpack.c.h.b16 %v348
        %v669 = vunpack.c.l.b16 %v349
        %v670 = vunpack.c.h.b16 %v349
        %v671 = vunpack.c.l.b16 %v350
        %v672 = vunpack.c.h.b16 %v350
        %v673 = vunpack.c.l.b16 %v351
        %v674 = vunpack.c.l.b16 %v352
        %v675 = vunpack.c.h.b16 %v352
        %v676 = vunpack.c.l.b16 %v353
        %v677 = vunpack.c.h.b16 %v353
        %v678 = vunpack.c.l.b16 %v354
        %v679 = vunpack.c.h.b16 %v354
        %v680 = vunpack.c.l.b16 %v355
        %v681 = vunpack.c.l.b16 %v356
        %v682 = vunpack.c.h.b16 %v356
        %v683 = vunpack.c.l.b16 %v357
        %v684 = vunpack.c.h.b16 %v357
        %v685 = vunpack.c.l.b16 %v358
        %v686 = vunpack.c.h.b16 %v358
        %v687 = vunpack.c.l.b16 %v359
        %v688 = vunpack.c.l.b16 %v360
        %v689 = vunpack.c.h.b16 %v360
        %v690 = vunpack.c.l.b16 %v361
        %v691 = vunpack.c.h.b16 %v361
        %v692 = vunpack.c.l.b16 %v362
        %v693 = vunpack.c.h.b16 %v362
        %v694 = vunpack.c.l.b16 %v363
        %v695 = vpack.c.b16 %v674, %v667
        %v696 = vpack.c.b16 %v675, %v668
        %v697 = vpack.c.b16 %v676, %v669
        %v698 = vpack.c.b16 %v677, %v670
        %v699 = vpack.c.b16 %v678, %v671
        %v700 = vpack.c.b16 %v679, %v672
        %v701 = vpack.c.b16 %v680, %v673
        %v702 = vpack.c.b16 %v688, %v681
        %v703 = vpack.c.b16 %v689, %v682
        %v704 = vpack.c.b16 %v690, %v683
        %v705 = vpack.c.b16 %v691, %v684
        %v706 = vpack.c.b16 %v692, %v685
        %v707 = vpack.c.b16 %v693, %v686
        %v708 = vpack.c.b16 %v694, %v687
        %vm721 = vcmask 130048
        %v723 = vsel %vm721, %v553, 0
        %v726 = vsel %vm721, %v560, 0
        %v729 = vsel %vm721, %v567, 0
        %v732 = vsel %vm721, %v574, 0
        %v735 = vsel %vm721, %v581, 0
        %v738 = vsel %vm721, %v588, 0
        %v741 = vsel %vm721, %v595, 0
        %v744 = vsel %vm721, %v602, 0
        %v747 = vsel %vm721, %v701, 0
        %v750 = vsel %vm721, %v708, 0
        %752 = vmatprep.subr.bf16.mxu0 %v696
        %753 = vmatpush1.bf16.xpose.msra.mxu0 %v695
        %754 = vmatprep.subr.bf16.mxu0 %v703
        %755 = vmatpush1.bf16.xpose.msra.mxu0 %v702
        %756 = vmatprep.subr.bf16.mxu0 0
        %757 = vmatpush1.bf16.xpose.msra.mxu0 0
        %758 = vmatprep.subr.bf16.mxu0 0
        %759 = vmatpush1.bf16.xpose.msra.mxu0 0
        %760 = vmatprep.subr.bf16.mxu0 0
        %761 = vmatpush1.bf16.xpose.msra.mxu0 0
        %762 = vmatprep.subr.bf16.mxu0 0
        %763 = vmatpush1.bf16.xpose.msra.mxu0 0
        %764 = vmatprep.subr.bf16.mxu0 0
        %765 = vmatpush1.bf16.xpose.msra.mxu0 0
        %766 = vmatprep.subr.bf16.mxu0 0
        %767 = vmatpush1.bf16.xpose.msra.mxu0 0
        %768 = vmatprep.subr.bf16.mxu0 0
        %769 = vmatpush1.bf16.xpose.msra.mxu0 0
        %770 = vmatprep.subr.bf16.mxu0 0
        %771 = vmatpush1.bf16.xpose.msra.mxu0 0
        %772 = vmatprep.subr.bf16.mxu0 0
        %773 = vmatpush1.bf16.xpose.msra.mxu0 0
        %774 = vmatprep.subr.bf16.mxu0 0
        %775 = vmatpush1.bf16.xpose.msra.mxu0 0
        %776 = vmatprep.subr.bf16.mxu0 0
        %777 = vmatpush1.bf16.xpose.msra.mxu0 0
        %778 = vmatprep.subr.bf16.mxu0 0
        %779 = vmatpush1.bf16.xpose.msra.mxu0 0
        %780 = vmatprep.subr.bf16.mxu0 0
        %781 = vmatpush1.bf16.xpose.msra.mxu0 0
        %782 = vmatprep.subr.bf16.mxu0 0
        %783 = vmatpush1.bf16.xpose.msra.mxu0 0
        %784 = vmatprep.mubr.bf16.mxu0 %v548
        %785 = vmatmul.mubr.bf16.gmra.mrb[0].mxu0 %v547
        %v786 = vpop.f32.mrb[0].mxu0
        %v787 = vadd.f32 %v369, %v786
        %v788 = vpop.f32.mrb[0].mxu0
        %v789 = vpop.f32.mrb[0].mxu0
        %v790 = vadd.f32 %v369, %v789
        %v791 = vpop.f32.mrb[0].mxu0
        %792 = vmatprep.mubr.bf16.mxu0 %v555
        %793 = vmatmul.mubr.bf16.gmra.mrb[0].mxu0 %v554
        %v794 = vpop.f32.mrb[0].mxu0
        %v795 = vadd.f32 %v369, %v794
        %v796 = vpop.f32.mrb[0].mxu0
        %v797 = vpop.f32.mrb[0].mxu0
        %v798 = vadd.f32 %v369, %v797
        %v799 = vpop.f32.mrb[0].mxu0
        %800 = vmatprep.mubr.bf16.mxu0 %v562
        %801 = vmatmul.mubr.bf16.gmra.mrb[0].mxu0 %v561
        %v802 = vpop.f32.mrb[0].mxu0
        %v803 = vadd.f32 %v369, %v802
        %v804 = vpop.f32.mrb[0].mxu0
        %v805 = vpop.f32.mrb[0].mxu0
        %v806 = vadd.f32 %v369, %v805
        %v807 = vpop.f32.mrb[0].mxu0
        %808 = vmatprep.mubr.bf16.mxu0 %v569
        %809 = vmatmul.mubr.bf16.gmra.mrb[0].mxu0 %v568
        %v810 = vpop.f32.mrb[0].mxu0
        %v811 = vadd.f32 %v369, %v810
        %v812 = vpop.f32.mrb[0].mxu0
        %v813 = vpop.f32.mrb[0].mxu0
        %v814 = vadd.f32 %v369, %v813
        %v815 = vpop.f32.mrb[0].mxu0
        %816 = vmatprep.mubr.bf16.mxu0 %v576
        %817 = vmatmul.mubr.bf16.gmra.mrb[0].mxu0 %v575
        %v818 = vpop.f32.mrb[0].mxu0
        %v819 = vadd.f32 %v369, %v818
        %v820 = vpop.f32.mrb[0].mxu0
        %v821 = vpop.f32.mrb[0].mxu0
        %v822 = vadd.f32 %v369, %v821
        %v823 = vpop.f32.mrb[0].mxu0
        %824 = vmatprep.mubr.bf16.mxu0 %v583
        %825 = vmatmul.mubr.bf16.gmra.mrb[0].mxu0 %v582
        %v826 = vpop.f32.mrb[0].mxu0
        %v827 = vadd.f32 %v369, %v826
        %v828 = vpop.f32.mrb[0].mxu0
        %v829 = vpop.f32.mrb[0].mxu0
        %v830 = vadd.f32 %v369, %v829
        %v831 = vpop.f32.mrb[0].mxu0
        %832 = vmatprep.mubr.bf16.mxu0 %v590
        %833 = vmatmul.mubr.bf16.gmra.mrb[0].mxu0 %v589
        %v834 = vpop.f32.mrb[0].mxu0
        %v835 = vadd.f32 %v369, %v834
        %v836 = vpop.f32.mrb[0].mxu0
        %v837 = vpop.f32.mrb[0].mxu0
        %v838 = vadd.f32 %v369, %v837
        %v839 = vpop.f32.mrb[0].mxu0
        %840 = vmatprep.mubr.bf16.mxu0 %v597
        %841 = vmatmul.mubr.bf16.gmra.mrb[0].mxu0 %v596
        %v842 = vpop.f32.mrb[0].mxu0
        %v843 = vadd.f32 %v369, %v842
        %v844 = vpop.f32.mrb[0].mxu0
        %v845 = vpop.f32.mrb[0].mxu0
        %v846 = vadd.f32 %v369, %v845
        %v847 = vpop.f32.mrb[0].mxu0
        %848 = vdwg.mxu0
        %849 = vmatprep.subr.bf16.mxu0 %v698
        %850 = vmatpush1.bf16.xpose.msra.mxu0 %v697
        %851 = vmatprep.subr.bf16.mxu0 %v705
        %852 = vmatpush1.bf16.xpose.msra.mxu0 %v704
        %853 = vmatprep.subr.bf16.mxu0 0
        %854 = vmatpush1.bf16.xpose.msra.mxu0 0
        %855 = vmatprep.subr.bf16.mxu0 0
        %856 = vmatpush1.bf16.xpose.msra.mxu0 0
        %857 = vmatprep.subr.bf16.mxu0 0
        %858 = vmatpush1.bf16.xpose.msra.mxu0 0
        %859 = vmatprep.subr.bf16.mxu0 0
        %860 = vmatpush1.bf16.xpose.msra.mxu0 0
        %861 = vmatprep.subr.bf16.mxu0 0
        %862 = vmatpush1.bf16.xpose.msra.mxu0 0
        %863 = vmatprep.subr.bf16.mxu0 0
        %864 = vmatpush1.bf16.xpose.msra.mxu0 0
        %865 = vmatprep.subr.bf16.mxu0 0
        %866 = vmatpush1.bf16.xpose.msra.mxu0 0
        %867 = vmatprep.subr.bf16.mxu0 0
        %868 = vmatpush1.bf16.xpose.msra.mxu0 0
        %869 = vmatprep.subr.bf16.mxu0 0
        %870 = vmatpush1.bf16.xpose.msra.mxu0 0
        %871 = vmatprep.subr.bf16.mxu0 0
        %872 = vmatpush1.bf16.xpose.msra.mxu0 0
        %873 = vmatprep.subr.bf16.mxu0 0
        %874 = vmatpush1.bf16.xpose.msra.mxu0 0
        %875 = vmatprep.subr.bf16.mxu0 0
        %876 = vmatpush1.bf16.xpose.msra.mxu0 0
        %877 = vmatprep.subr.bf16.mxu0 0
        %878 = vmatpush1.bf16.xpose.msra.mxu0 0
        %879 = vmatprep.subr.bf16.mxu0 0
        %880 = vmatpush1.bf16.xpose.msra.mxu0 0
        %881 = vmatprep.mubr.bf16.mxu0 %v550
        %882 = vmatmul.mubr.bf16.gmra.mrb[0].mxu0 %v549
        %v883 = vpop.f32.mrb[0].mxu0
        %v884 = vadd.f32 %v787, %v883
        %v885 = vpop.f32.mrb[0].mxu0
        %v886 = vpop.f32.mrb[0].mxu0
        %v887 = vadd.f32 %v790, %v886
        %v888 = vpop.f32.mrb[0].mxu0
        %889 = vmatprep.mubr.bf16.mxu0 %v557
        %890 = vmatmul.mubr.bf16.gmra.mrb[0].mxu0 %v556
        %v891 = vpop.f32.mrb[0].mxu0
        %v892 = vadd.f32 %v795, %v891
        %v893 = vpop.f32.mrb[0].mxu0
        %v894 = vpop.f32.mrb[0].mxu0
        %v895 = vadd.f32 %v798, %v894
        %v896 = vpop.f32.mrb[0].mxu0
        %897 = vmatprep.mubr.bf16.mxu0 %v564
        %898 = vmatmul.mubr.bf16.gmra.mrb[0].mxu0 %v563
        %v899 = vpop.f32.mrb[0].mxu0
        %v900 = vadd.f32 %v803, %v899
        %v901 = vpop.f32.mrb[0].mxu0
        %v902 = vpop.f32.mrb[0].mxu0
        %v903 = vadd.f32 %v806, %v902
        %v904 = vpop.f32.mrb[0].mxu0
        %905 = vmatprep.mubr.bf16.mxu0 %v571
        %906 = vmatmul.mubr.bf16.gmra.mrb[0].mxu0 %v570
        %v907 = vpop.f32.mrb[0].mxu0
        %v908 = vadd.f32 %v811, %v907
        %v909 = vpop.f32.mrb[0].mxu0
        %v910 = vpop.f32.mrb[0].mxu0
        %v911 = vadd.f32 %v814, %v910
        %v912 = vpop.f32.mrb[0].mxu0
        %913 = vmatprep.mubr.bf16.mxu0 %v578
        %914 = vmatmul.mubr.bf16.gmra.mrb[0].mxu0 %v577
        %v915 = vpop.f32.mrb[0].mxu0
        %v916 = vadd.f32 %v819, %v915
        %v917 = vpop.f32.mrb[0].mxu0
        %v918 = vpop.f32.mrb[0].mxu0
        %v919 = vadd.f32 %v822, %v918
        %v920 = vpop.f32.mrb[0].mxu0
        %921 = vmatprep.mubr.bf16.mxu0 %v585
        %922 = vmatmul.mubr.bf16.gmra.mrb[0].mxu0 %v584
        %v923 = vpop.f32.mrb[0].mxu0
        %v924 = vadd.f32 %v827, %v923
        %v925 = vpop.f32.mrb[0].mxu0
        %v926 = vpop.f32.mrb[0].mxu0
        %v927 = vadd.f32 %v830, %v926
        %v928 = vpop.f32.mrb[0].mxu0
        %929 = vmatprep.mubr.bf16.mxu0 %v592
        %930 = vmatmul.mubr.bf16.gmra.mrb[0].mxu0 %v591
        %v931 = vpop.f32.mrb[0].mxu0
        %v932 = vadd.f32 %v835, %v931
        %v933 = vpop.f32.mrb[0].mxu0
        %v934 = vpop.f32.mrb[0].mxu0
        %v935 = vadd.f32 %v838, %v934
        %v936 = vpop.f32.mrb[0].mxu0
        %937 = vmatprep.mubr.bf16.mxu0 %v599
        %938 = vmatmul.mubr.bf16.gmra.mrb[0].mxu0 %v598
        %v939 = vpop.f32.mrb[0].mxu0
        %v940 = vadd.f32 %v843, %v939
        %v941 = vpop.f32.mrb[0].mxu0
        %v942 = vpop.f32.mrb[0].mxu0
        %v943 = vadd.f32 %v846, %v942
        %v944 = vpop.f32.mrb[0].mxu0
        %945 = vdwg.mxu0
        %946 = vmatprep.subr.bf16.mxu0 %v700
        %947 = vmatpush1.bf16.xpose.msra.mxu0 %v699
        %948 = vmatprep.subr.bf16.mxu0 %v707
        %949 = vmatpush1.bf16.xpose.msra.mxu0 %v706
        %950 = vmatprep.subr.bf16.mxu0 0
        %951 = vmatpush1.bf16.xpose.msra.mxu0 0
        %952 = vmatprep.subr.bf16.mxu0 0
        %953 = vmatpush1.bf16.xpose.msra.mxu0 0
        %954 = vmatprep.subr.bf16.mxu0 0
        %955 = vmatpush1.bf16.xpose.msra.mxu0 0
        %956 = vmatprep.subr.bf16.mxu0 0
        %957 = vmatpush1.bf16.xpose.msra.mxu0 0
        %958 = vmatprep.subr.bf16.mxu0 0
        %959 = vmatpush1.bf16.xpose.msra.mxu0 0
        %960 = vmatprep.subr.bf16.mxu0 0
        %961 = vmatpush1.bf16.xpose.msra.mxu0 0
        %962 = vmatprep.subr.bf16.mxu0 0
        %963 = vmatpush1.bf16.xpose.msra.mxu0 0
        %964 = vmatprep.subr.bf16.mxu0 0
        %965 = vmatpush1.bf16.xpose.msra.mxu0 0
        %966 = vmatprep.subr.bf16.mxu0 0
        %967 = vmatpush1.bf16.xpose.msra.mxu0 0
        %968 = vmatprep.subr.bf16.mxu0 0
        %969 = vmatpush1.bf16.xpose.msra.mxu0 0
        %970 = vmatprep.subr.bf16.mxu0 0
        %971 = vmatpush1.bf16.xpose.msra.mxu0 0
        %972 = vmatprep.subr.bf16.mxu0 0
        %973 = vmatpush1.bf16.xpose.msra.mxu0 0
        %974 = vmatprep.subr.bf16.mxu0 0
        %975 = vmatpush1.bf16.xpose.msra.mxu0 0
        %976 = vmatprep.subr.bf16.mxu0 0
        %977 = vmatpush1.bf16.xpose.msra.mxu0 0
        %978 = vmatprep.mubr.bf16.mxu0 %v552
        %979 = vmatmul.mubr.bf16.gmra.mrb[0].mxu0 %v551
        %v980 = vpop.f32.mrb[0].mxu0
        %v981 = vadd.f32 %v884, %v980
        %v982 = vpop.f32.mrb[0].mxu0
        %v983 = vpop.f32.mrb[0].mxu0
        %v984 = vadd.f32 %v887, %v983
        %v985 = vpop.f32.mrb[0].mxu0
        %986 = vmatprep.mubr.bf16.mxu0 %v559
        %987 = vmatmul.mubr.bf16.gmra.mrb[0].mxu0 %v558
        %v988 = vpop.f32.mrb[0].mxu0
        %v989 = vadd.f32 %v892, %v988
        %v990 = vpop.f32.mrb[0].mxu0
        %v991 = vpop.f32.mrb[0].mxu0
        %v992 = vadd.f32 %v895, %v991
        %v993 = vpop.f32.mrb[0].mxu0
        %994 = vmatprep.mubr.bf16.mxu0 %v566
        %995 = vmatmul.mubr.bf16.gmra.mrb[0].mxu0 %v565
        %v996 = vpop.f32.mrb[0].mxu0
        %v997 = vadd.f32 %v900, %v996
        %v998 = vpop.f32.mrb[0].mxu0
        %v999 = vpop.f32.mrb[0].mxu0
        %v1000 = vadd.f32 %v903, %v999
        %v1001 = vpop.f32.mrb[0].mxu0
        %1002 = vmatprep.mubr.bf16.mxu0 %v573
        %1003 = vmatmul.mubr.bf16.gmra.mrb[0].mxu0 %v572
        %v1004 = vpop.f32.mrb[0].mxu0
        %v1005 = vadd.f32 %v908, %v1004
        %v1006 = vpop.f32.mrb[0].mxu0
        %v1007 = vpop.f32.mrb[0].mxu0
        %v1008 = vadd.f32 %v911, %v1007
        %v1009 = vpop.f32.mrb[0].mxu0
        %1010 = vmatprep.mubr.bf16.mxu0 %v580
        %1011 = vmatmul.mubr.bf16.gmra.mrb[0].mxu0 %v579
        %v1012 = vpop.f32.mrb[0].mxu0
        %v1013 = vadd.f32 %v916, %v1012
        %v1014 = vpop.f32.mrb[0].mxu0
        %v1015 = vpop.f32.mrb[0].mxu0
        %v1016 = vadd.f32 %v919, %v1015
        %v1017 = vpop.f32.mrb[0].mxu0
        %1018 = vmatprep.mubr.bf16.mxu0 %v587
        %1019 = vmatmul.mubr.bf16.gmra.mrb[0].mxu0 %v586
        %v1020 = vpop.f32.mrb[0].mxu0
        %v1021 = vadd.f32 %v924, %v1020
        %v1022 = vpop.f32.mrb[0].mxu0
        %v1023 = vpop.f32.mrb[0].mxu0
        %v1024 = vadd.f32 %v927, %v1023
        %v1025 = vpop.f32.mrb[0].mxu0
        %1026 = vmatprep.mubr.bf16.mxu0 %v594
        %1027 = vmatmul.mubr.bf16.gmra.mrb[0].mxu0 %v593
        %v1028 = vpop.f32.mrb[0].mxu0
        %v1029 = vadd.f32 %v932, %v1028
        %v1030 = vpop.f32.mrb[0].mxu0
        %v1031 = vpop.f32.mrb[0].mxu0
        %v1032 = vadd.f32 %v935, %v1031
        %v1033 = vpop.f32.mrb[0].mxu0
        %1034 = vmatprep.mubr.bf16.mxu0 %v601
        %1035 = vmatmul.mubr.bf16.gmra.mrb[0].mxu0 %v600
        %v1036 = vpop.f32.mrb[0].mxu0
        %v1037 = vadd.f32 %v940, %v1036
        %v1038 = vpop.f32.mrb[0].mxu0
        %v1039 = vpop.f32.mrb[0].mxu0
        %v1040 = vadd.f32 %v943, %v1039
        %v1041 = vpop.f32.mrb[0].mxu0
        %1042 = vdwg.mxu0
        %1043 = vmatprep.subr.bf16.mxu0 0
        %1044 = vmatpush1.bf16.xpose.msra.mxu0 %v747
        %1045 = vmatprep.subr.bf16.mxu0 0
        %1046 = vmatpush1.bf16.xpose.msra.mxu0 %v750
        %1047 = vmatprep.subr.bf16.mxu0 0
        %1048 = vmatpush1.bf16.xpose.msra.mxu0 0
        %1049 = vmatprep.subr.bf16.mxu0 0
        %1050 = vmatpush1.bf16.xpose.msra.mxu0 0
        %1051 = vmatprep.subr.bf16.mxu0 0
        %1052 = vmatpush1.bf16.xpose.msra.mxu0 0
        %1053 = vmatprep.subr.bf16.mxu0 0
        %1054 = vmatpush1.bf16.xpose.msra.mxu0 0
        %1055 = vmatprep.subr.bf16.mxu0 0
        %1056 = vmatpush1.bf16.xpose.msra.mxu0 0
        %1057 = vmatprep.subr.bf16.mxu0 0
        %1058 = vmatpush1.bf16.xpose.msra.mxu0 0
        %1059 = vmatprep.subr.bf16.mxu0 0
        %1060 = vmatpush1.bf16.xpose.msra.mxu0 0
        %1061 = vmatprep.subr.bf16.mxu0 0
        %1062 = vmatpush1.bf16.xpose.msra.mxu0 0
        %1063 = vmatprep.subr.bf16.mxu0 0
        %1064 = vmatpush1.bf16.xpose.msra.mxu0 0
        %1065 = vmatprep.subr.bf16.mxu0 0
        %1066 = vmatpush1.bf16.xpose.msra.mxu0 0
        %1067 = vmatprep.subr.bf16.mxu0 0
        %1068 = vmatpush1.bf16.xpose.msra.mxu0 0
        %1069 = vmatprep.subr.bf16.mxu0 0
        %1070 = vmatpush1.bf16.xpose.msra.mxu0 0
        %1071 = vmatprep.subr.bf16.mxu0 0
        %1072 = vmatpush1.bf16.xpose.msra.mxu0 0
        %1073 = vmatprep.subr.bf16.mxu0 0
        %1074 = vmatpush1.bf16.xpose.msra.mxu0 0
        %1075 = vmatprep.mubr.bf16.mxu0 0
        %1076 = vmatmul.mubr.bf16.gmra.mrb[0].mxu0 %v723
        %v1077 = vpop.f32.mrb[0].mxu0
        %v1078 = vadd.f32 %v981, %v1077
        %v1079 = vpop.f32.mrb[0].mxu0
        %v1080 = vpop.f32.mrb[0].mxu0
        %v1081 = vadd.f32 %v984, %v1080
        %v1082 = vpop.f32.mrb[0].mxu0
        %1083 = vmatprep.mubr.bf16.mxu0 0
        %1084 = vmatmul.mubr.bf16.gmra.mrb[0].mxu0 %v726
        %v1085 = vpop.f32.mrb[0].mxu0
        %v1086 = vadd.f32 %v989, %v1085
        %v1087 = vpop.f32.mrb[0].mxu0
        %v1088 = vpop.f32.mrb[0].mxu0
        %v1089 = vadd.f32 %v992, %v1088
        %v1090 = vpop.f32.mrb[0].mxu0
        %1091 = vmatprep.mubr.bf16.mxu0 0
        %1092 = vmatmul.mubr.bf16.gmra.mrb[0].mxu0 %v729
        %v1093 = vpop.f32.mrb[0].mxu0
        %v1094 = vadd.f32 %v997, %v1093
        %v1095 = vpop.f32.mrb[0].mxu0
        %v1096 = vpop.f32.mrb[0].mxu0
        %v1097 = vadd.f32 %v1000, %v1096
        %v1098 = vpop.f32.mrb[0].mxu0
        %1099 = vmatprep.mubr.bf16.mxu0 0
        %1100 = vmatmul.mubr.bf16.gmra.mrb[0].mxu0 %v732
        %v1101 = vpop.f32.mrb[0].mxu0
        %v1102 = vadd.f32 %v1005, %v1101
        %v1103 = vpop.f32.mrb[0].mxu0
        %v1104 = vpop.f32.mrb[0].mxu0
        %v1105 = vadd.f32 %v1008, %v1104
        %v1106 = vpop.f32.mrb[0].mxu0
        %1107 = vmatprep.mubr.bf16.mxu0 0
        %1108 = vmatmul.mubr.bf16.gmra.mrb[0].mxu0 %v735
        %v1109 = vpop.f32.mrb[0].mxu0
        %v1110 = vadd.f32 %v1013, %v1109
        %v1111 = vpop.f32.mrb[0].mxu0
        %v1112 = vpop.f32.mrb[0].mxu0
        %v1113 = vadd.f32 %v1016, %v1112
        %v1114 = vpop.f32.mrb[0].mxu0
        %1115 = vmatprep.mubr.bf16.mxu0 0
        %1116 = vmatmul.mubr.bf16.gmra.mrb[0].mxu0 %v738
        %v1117 = vpop.f32.mrb[0].mxu0
        %v1118 = vadd.f32 %v1021, %v1117
        %v1119 = vpop.f32.mrb[0].mxu0
        %v1120 = vpop.f32.mrb[0].mxu0
        %v1121 = vadd.f32 %v1024, %v1120
        %v1122 = vpop.f32.mrb[0].mxu0
        %1123 = vmatprep.mubr.bf16.mxu0 0
        %1124 = vmatmul.mubr.bf16.gmra.mrb[0].mxu0 %v741
        %v1125 = vpop.f32.mrb[0].mxu0
        %v1126 = vadd.f32 %v1029, %v1125
        %v1127 = vpop.f32.mrb[0].mxu0
        %v1128 = vpop.f32.mrb[0].mxu0
        %v1129 = vadd.f32 %v1032, %v1128
        %v1130 = vpop.f32.mrb[0].mxu0
        %1131 = vmatprep.mubr.bf16.mxu0 0
        %1132 = vmatmul.mubr.bf16.gmra.mrb[0].mxu0 %v744
        %v1133 = vpop.f32.mrb[0].mxu0
        %v1134 = vadd.f32 %v1037, %v1133
        %v1135 = vpop.f32.mrb[0].mxu0
        %v1136 = vpop.f32.mrb[0].mxu0
        %v1137 = vadd.f32 %v1040, %v1136
        %v1138 = vpop.f32.mrb[0].mxu0
        %1139 = vdwg.mxu0
        %v1140 = vmax.f32 %v1078, 0.0
        %v1141 = vmax.f32 %v1081, 0.0
        %v1142 = vmax.f32 %v1086, 0.0
        %v1143 = vmax.f32 %v1089, 0.0
        %v1144 = vmax.f32 %v1094, 0.0
        %v1145 = vmax.f32 %v1097, 0.0
        %v1146 = vmax.f32 %v1102, 0.0
        %v1147 = vmax.f32 %v1105, 0.0
        %v1148 = vmax.f32 %v1110, 0.0
        %v1149 = vmax.f32 %v1113, 0.0
        %v1150 = vmax.f32 %v1118, 0.0
        %v1151 = vmax.f32 %v1121, 0.0
        %v1152 = vmax.f32 %v1126, 0.0
        %v1153 = vmax.f32 %v1129, 0.0
        %v1154 = vmax.f32 %v1134, 0.0
        %v1155 = vmax.f32 %v1137, 0.0
        %v1156 = vpack.c.bf16 %v1141, %v1140
        %v1157 = vpack.c.bf16 %v1143, %v1142
        %v1158 = vpack.c.bf16 %v1145, %v1144
        %v1159 = vpack.c.bf16 %v1147, %v1146
        %v1160 = vpack.c.bf16 %v1149, %v1148
        %v1161 = vpack.c.bf16 %v1151, %v1150
        %v1162 = vpack.c.bf16 %v1153, %v1152
        %v1163 = vpack.c.bf16 %v1155, %v1154
        %v1164 = vld [vmem:[%s3] sm:$0xf]
        %v1165 = vld [vmem:[%s3 + $0x4] sm:$0xf]
        %v1166 = vld [vmem:[%s3 + $0x8] sm:$0x3]
        %v1167 = vld [vmem:[%s4] sm:$0x1]
        %v1169 = vlaneseq
        %v1170 = vshrl.u32 %v1169, 7
        %v1171 = vsub.s32 0, %v1170
        %v1172 = vrot.slane %v1167, %v1171
        %v1177 = vunpack.c.l.b16 %v1164
        %v1178 = vunpack.c.l.b16 %v1165
        %v1179 = vunpack.c.l.b16 %v1166
        %v1180 = vpack.c.b16 %v1178, %v1177
        %v1181 = vpack.c.b16 %v1179, %v1179
        %vm1182 = vcmask 244736
        %v1184 = vsel %vm1182, %v1156, 0
        %v1187 = vsel %vm1182, %v1157, 0
        %v1190 = vsel %vm1182, %v1158, 0
        %v1193 = vsel %vm1182, %v1159, 0
        %v1196 = vsel %vm1182, %v1160, 0
        %v1199 = vsel %vm1182, %v1161, 0
        %v1202 = vsel %vm1182, %v1162, 0
        %v1205 = vsel %vm1182, %v1163, 0
        %v1208 = vsel %vm1182, %v1180, 0
        %v1211 = vsel %vm1182, %v1181, 0
        %1213 = vmatprep.subr.bf16.mxu0 0
        %1214 = vmatpush1.bf16.xpose.msra.mxu0 %v1208
        %1215 = vmatprep.subr.bf16.mxu0 0
        %1216 = vmatpush1.bf16.xpose.msra.mxu0 %v1211
        %1217 = vmatprep.subr.bf16.mxu0 0
        %1218 = vmatpush1.bf16.xpose.msra.mxu0 0
        %1219 = vmatprep.subr.bf16.mxu0 0
        %1220 = vmatpush1.bf16.xpose.msra.mxu0 0
        %1221 = vmatprep.subr.bf16.mxu0 0
        %1222 = vmatpush1.bf16.xpose.msra.mxu0 0
        %1223 = vmatprep.subr.bf16.mxu0 0
        %1224 = vmatpush1.bf16.xpose.msra.mxu0 0
        %1225 = vmatprep.subr.bf16.mxu0 0
        %1226 = vmatpush1.bf16.xpose.msra.mxu0 0
        %1227 = vmatprep.subr.bf16.mxu0 0
        %1228 = vmatpush1.bf16.xpose.msra.mxu0 0
        %1229 = vmatprep.subr.bf16.mxu0 0
        %1230 = vmatpush1.bf16.xpose.msra.mxu0 0
        %1231 = vmatprep.subr.bf16.mxu0 0
        %1232 = vmatpush1.bf16.xpose.msra.mxu0 0
        %1233 = vmatprep.subr.bf16.mxu0 0
        %1234 = vmatpush1.bf16.xpose.msra.mxu0 0
        %1235 = vmatprep.subr.bf16.mxu0 0
        %1236 = vmatpush1.bf16.xpose.msra.mxu0 0
        %1237 = vmatprep.subr.bf16.mxu0 0
        %1238 = vmatpush1.bf16.xpose.msra.mxu0 0
        %1239 = vmatprep.subr.bf16.mxu0 0
        %1240 = vmatpush1.bf16.xpose.msra.mxu0 0
        %1241 = vmatprep.subr.bf16.mxu0 0
        %1242 = vmatpush1.bf16.xpose.msra.mxu0 0
        %1243 = vmatprep.subr.bf16.mxu0 0
        %1244 = vmatpush1.bf16.xpose.msra.mxu0 0
        %1245 = vmatprep.mubr.bf16.mxu0 0
        %1246 = vmatmul.mubr.bf16.gmra.mrb[0].mxu0 %v1184
        %v1247 = vpop.f32.mrb[0].mxu0
        %v1248 = vadd.f32 %v1172, %v1247
        %v1249 = vpop.f32.mrb[0].mxu0
        %v1250 = vpop.f32.mrb[0].mxu0
        %v1251 = vadd.f32 %v1172, %v1250
        %v1252 = vpop.f32.mrb[0].mxu0
        %1253 = vmatprep.mubr.bf16.mxu0 0
        %1254 = vmatmul.mubr.bf16.gmra.mrb[0].mxu0 %v1187
        %v1255 = vpop.f32.mrb[0].mxu0
        %v1256 = vadd.f32 %v1172, %v1255
        %v1257 = vpop.f32.mrb[0].mxu0
        %v1258 = vpop.f32.mrb[0].mxu0
        %v1259 = vadd.f32 %v1172, %v1258
        %v1260 = vpop.f32.mrb[0].mxu0
        %1261 = vmatprep.mubr.bf16.mxu0 0
        %1262 = vmatmul.mubr.bf16.gmra.mrb[0].mxu0 %v1190
        %v1263 = vpop.f32.mrb[0].mxu0
        %v1264 = vadd.f32 %v1172, %v1263
        %v1265 = vpop.f32.mrb[0].mxu0
        %v1266 = vpop.f32.mrb[0].mxu0
        %v1267 = vadd.f32 %v1172, %v1266
        %v1268 = vpop.f32.mrb[0].mxu0
        %1269 = vmatprep.mubr.bf16.mxu0 0
        %1270 = vmatmul.mubr.bf16.gmra.mrb[0].mxu0 %v1193
        %v1271 = vpop.f32.mrb[0].mxu0
        %v1272 = vadd.f32 %v1172, %v1271
        %v1273 = vpop.f32.mrb[0].mxu0
        %v1274 = vpop.f32.mrb[0].mxu0
        %v1275 = vadd.f32 %v1172, %v1274
        %v1276 = vpop.f32.mrb[0].mxu0
        %1277 = vmatprep.mubr.bf16.mxu0 0
        %1278 = vmatmul.mubr.bf16.gmra.mrb[0].mxu0 %v1196
        %v1279 = vpop.f32.mrb[0].mxu0
        %v1280 = vadd.f32 %v1172, %v1279
        %v1281 = vpop.f32.mrb[0].mxu0
        %v1282 = vpop.f32.mrb[0].mxu0
        %v1283 = vadd.f32 %v1172, %v1282
        %v1284 = vpop.f32.mrb[0].mxu0
        %1285 = vmatprep.mubr.bf16.mxu0 0
        %1286 = vmatmul.mubr.bf16.gmra.mrb[0].mxu0 %v1199
        %v1287 = vpop.f32.mrb[0].mxu0
        %v1288 = vadd.f32 %v1172, %v1287
        %v1289 = vpop.f32.mrb[0].mxu0
        %v1290 = vpop.f32.mrb[0].mxu0
        %v1291 = vadd.f32 %v1172, %v1290
        %v1292 = vpop.f32.mrb[0].mxu0
        %1293 = vmatprep.mubr.bf16.mxu0 0
        %1294 = vmatmul.mubr.bf16.gmra.mrb[0].mxu0 %v1202
        %v1295 = vpop.f32.mrb[0].mxu0
        %v1296 = vadd.f32 %v1172, %v1295
        %v1297 = vpop.f32.mrb[0].mxu0
        %v1298 = vpop.f32.mrb[0].mxu0
        %v1299 = vadd.f32 %v1172, %v1298
        %v1300 = vpop.f32.mrb[0].mxu0
        %1301 = vmatprep.mubr.bf16.mxu0 0
        %1302 = vmatmul.mubr.bf16.gmra.mrb[0].mxu0 %v1205
        %v1303 = vpop.f32.mrb[0].mxu0
        %v1304 = vadd.f32 %v1172, %v1303
        %v1305 = vpop.f32.mrb[0].mxu0
        %v1306 = vpop.f32.mrb[0].mxu0
        %v1307 = vadd.f32 %v1172, %v1306
        %v1308 = vpop.f32.mrb[0].mxu0
        %1309 = vdwg.mxu0
        %v1310 = vmax.f32 %v1248, 0.0
        %v1311 = vmax.f32 %v1251, 0.0
        %v1312 = vmax.f32 %v1256, 0.0
        %v1313 = vmax.f32 %v1259, 0.0
        %v1314 = vmax.f32 %v1264, 0.0
        %v1315 = vmax.f32 %v1267, 0.0
        %v1316 = vmax.f32 %v1272, 0.0
        %v1317 = vmax.f32 %v1275, 0.0
        %v1318 = vmax.f32 %v1280, 0.0
        %v1319 = vmax.f32 %v1283, 0.0
        %v1320 = vmax.f32 %v1288, 0.0
        %v1321 = vmax.f32 %v1291, 0.0
        %v1322 = vmax.f32 %v1296, 0.0
        %v1323 = vmax.f32 %v1299, 0.0
        %v1324 = vmax.f32 %v1304, 0.0
        %v1325 = vmax.f32 %v1307, 0.0
        %v1326 = vpack.c.bf16 %v1311, %v1310
        %v1327 = vpack.c.bf16 %v1313, %v1312
        %v1328 = vpack.c.bf16 %v1315, %v1314
        %v1329 = vpack.c.bf16 %v1317, %v1316
        %v1330 = vpack.c.bf16 %v1319, %v1318
        %v1331 = vpack.c.bf16 %v1321, %v1320
        %v1332 = vpack.c.bf16 %v1323, %v1322
        %v1333 = vpack.c.bf16 %v1325, %v1324
        %v1334 = vld [vmem:[%s5] sm:$0xf]
        %v1335 = vld [vmem:[%s5 + $0x4] sm:$0xf]
        %v1336 = vld [vmem:[%s5 + $0x8] sm:$0xf]
        %v1337 = vld [vmem:[%s5 + $0xc] sm:$0xf]
        %v1338 = vld [vmem:[%s5 + $0x10] sm:$0xf]
        %v1339 = vld [vmem:[%s5 + $0x14] sm:$0xf]
        %v1340 = vld [vmem:[%s5 + $0x18] sm:$0xf]
        %v1341 = vld [vmem:[%s5 + $0x1c] sm:$0xf]
        %v1342 = vld [vmem:[%s5 + $0x20] sm:$0xf]
        %v1343 = vld [vmem:[%s5 + $0x24] sm:$0xf]
        %v1344 = vld [vmem:[%s5 + $0x28] sm:$0xf]
        %v1345 = vld [vmem:[%s5 + $0x2c] sm:$0xf]
        %v1346 = vld [vmem:[%s5 + $0x30] sm:$0xf]
        %v1347 = vld [vmem:[%s5 + $0x34] sm:$0xf]
        %v1348 = vld [vmem:[%s5 + $0x38] sm:$0xf]
        %v1349 = vld [vmem:[%s5 + $0x3c] sm:$0xf]
        %v1350 = vld [vmem:[%s6] sm:$0x1]
        %v1352 = vlaneseq
        %v1353 = vshrl.u32 %v1352, 7
        %v1354 = vsub.s32 0, %v1353
        %v1355 = vrot.slane %v1350, %v1354
        %v1373 = vunpack.c.l.b16 %v1334
        %v1374 = vunpack.c.l.b16 %v1335
        %v1375 = vunpack.c.l.b16 %v1336
        %v1376 = vunpack.c.l.b16 %v1337
        %v1377 = vunpack.c.l.b16 %v1338
        %v1378 = vunpack.c.l.b16 %v1339
        %v1379 = vunpack.c.l.b16 %v1340
        %v1380 = vunpack.c.l.b16 %v1341
        %v1381 = vunpack.c.l.b16 %v1342
        %v1382 = vunpack.c.l.b16 %v1343
        %v1383 = vunpack.c.l.b16 %v1344
        %v1384 = vunpack.c.l.b16 %v1345
        %v1385 = vunpack.c.l.b16 %v1346
        %v1386 = vunpack.c.l.b16 %v1347
        %v1387 = vunpack.c.l.b16 %v1348
        %v1388 = vunpack.c.l.b16 %v1349
        %v1389 = vpack.c.b16 %v1374, %v1373
        %v1390 = vpack.c.b16 %v1376, %v1375
        %v1391 = vpack.c.b16 %v1378, %v1377
        %v1392 = vpack.c.b16 %v1380, %v1379
        %v1393 = vpack.c.b16 %v1382, %v1381
        %v1394 = vpack.c.b16 %v1384, %v1383
        %v1395 = vpack.c.b16 %v1386, %v1385
        %v1396 = vpack.c.b16 %v1388, %v1387
        %vm1397 = vcmask 162816
        %v1399 = vsel %vm1397, %v1326, 0
        %v1402 = vsel %vm1397, %v1327, 0
        %v1405 = vsel %vm1397, %v1328, 0
        %v1408 = vsel %vm1397, %v1329, 0
        %v1411 = vsel %vm1397, %v1330, 0
        %v1414 = vsel %vm1397, %v1331, 0
        %v1417 = vsel %vm1397, %v1332, 0
        %v1420 = vsel %vm1397, %v1333, 0
        %v1423 = vsel %vm1397, %v1389, 0
        %v1426 = vsel %vm1397, %v1390, 0
        %v1429 = vsel %vm1397, %v1391, 0
        %v1432 = vsel %vm1397, %v1392, 0
        %v1435 = vsel %vm1397, %v1393, 0
        %v1438 = vsel %vm1397, %v1394, 0
        %v1441 = vsel %vm1397, %v1395, 0
        %v1444 = vsel %vm1397, %v1396, 0
        %1446 = vmatprep.subr.bf16.mxu0 0
        %1447 = vmatpush1.bf16.xpose.msra.mxu0 %v1423
        %1448 = vmatprep.subr.bf16.mxu0 0
        %1449 = vmatpush1.bf16.xpose.msra.mxu0 %v1426
        %1450 = vmatprep.subr.bf16.mxu0 0
        %1451 = vmatpush1.bf16.xpose.msra.mxu0 %v1429
        %1452 = vmatprep.subr.bf16.mxu0 0
        %1453 = vmatpush1.bf16.xpose.msra.mxu0 %v1432
        %1454 = vmatprep.subr.bf16.mxu0 0
        %1455 = vmatpush1.bf16.xpose.msra.mxu0 %v1435
        %1456 = vmatprep.subr.bf16.mxu0 0
        %1457 = vmatpush1.bf16.xpose.msra.mxu0 %v1438
        %1458 = vmatprep.subr.bf16.mxu0 0
        %1459 = vmatpush1.bf16.xpose.msra.mxu0 %v1441
        %1460 = vmatprep.subr.bf16.mxu0 0
        %1461 = vmatpush1.bf16.xpose.msra.mxu0 %v1444
        %1462 = vmatprep.subr.bf16.mxu0 0
        %1463 = vmatpush1.bf16.xpose.msra.mxu0 0
        %1464 = vmatprep.subr.bf16.mxu0 0
        %1465 = vmatpush1.bf16.xpose.msra.mxu0 0
        %1466 = vmatprep.subr.bf16.mxu0 0
        %1467 = vmatpush1.bf16.xpose.msra.mxu0 0
        %1468 = vmatprep.subr.bf16.mxu0 0
        %1469 = vmatpush1.bf16.xpose.msra.mxu0 0
        %1470 = vmatprep.subr.bf16.mxu0 0
        %1471 = vmatpush1.bf16.xpose.msra.mxu0 0
        %1472 = vmatprep.subr.bf16.mxu0 0
        %1473 = vmatpush1.bf16.xpose.msra.mxu0 0
        %1474 = vmatprep.subr.bf16.mxu0 0
        %1475 = vmatpush1.bf16.xpose.msra.mxu0 0
        %1476 = vmatprep.subr.bf16.mxu0 0
        %1477 = vmatpush1.bf16.xpose.msra.mxu0 0
        %1478 = vmatprep.mubr.bf16.mxu0 0
        %1479 = vmatmul.mubr.bf16.gmra.mrb[0].mxu0 %v1399
        %v1480 = vpop.f32.mrb[0].mxu0
        %v1481 = vadd.f32 %v1355, %v1480
        %v1482 = vpop.f32.mrb[0].mxu0
        %v1483 = vpop.f32.mrb[0].mxu0
        %v1484 = vadd.f32 %v1355, %v1483
        %v1485 = vpop.f32.mrb[0].mxu0
        %1486 = vmatprep.mubr.bf16.mxu0 0
        %1487 = vmatmul.mubr.bf16.gmra.mrb[0].mxu0 %v1402
        %v1488 = vpop.f32.mrb[0].mxu0
        %v1489 = vadd.f32 %v1355, %v1488
        %v1490 = vpop.f32.mrb[0].mxu0
        %v1491 = vpop.f32.mrb[0].mxu0
        %v1492 = vadd.f32 %v1355, %v1491
        %v1493 = vpop.f32.mrb[0].mxu0
        %1494 = vmatprep.mubr.bf16.mxu0 0
        %1495 = vmatmul.mubr.bf16.gmra.mrb[0].mxu0 %v1405
        %v1496 = vpop.f32.mrb[0].mxu0
        %v1497 = vadd.f32 %v1355, %v1496
        %v1498 = vpop.f32.mrb[0].mxu0
        %v1499 = vpop.f32.mrb[0].mxu0
        %v1500 = vadd.f32 %v1355, %v1499
        %v1501 = vpop.f32.mrb[0].mxu0
        %1502 = vmatprep.mubr.bf16.mxu0 0
        %1503 = vmatmul.mubr.bf16.gmra.mrb[0].mxu0 %v1408
        %v1504 = vpop.f32.mrb[0].mxu0
        %v1505 = vadd.f32 %v1355, %v1504
        %v1506 = vpop.f32.mrb[0].mxu0
        %v1507 = vpop.f32.mrb[0].mxu0
        %v1508 = vadd.f32 %v1355, %v1507
        %v1509 = vpop.f32.mrb[0].mxu0
        %1510 = vmatprep.mubr.bf16.mxu0 0
        %1511 = vmatmul.mubr.bf16.gmra.mrb[0].mxu0 %v1411
        %v1512 = vpop.f32.mrb[0].mxu0
        %v1513 = vadd.f32 %v1355, %v1512
        %v1514 = vpop.f32.mrb[0].mxu0
        %v1515 = vpop.f32.mrb[0].mxu0
        %v1516 = vadd.f32 %v1355, %v1515
        %v1517 = vpop.f32.mrb[0].mxu0
        %1518 = vmatprep.mubr.bf16.mxu0 0
        %1519 = vmatmul.mubr.bf16.gmra.mrb[0].mxu0 %v1414
        %v1520 = vpop.f32.mrb[0].mxu0
        %v1521 = vadd.f32 %v1355, %v1520
        %v1522 = vpop.f32.mrb[0].mxu0
        %v1523 = vpop.f32.mrb[0].mxu0
        %v1524 = vadd.f32 %v1355, %v1523
        %v1525 = vpop.f32.mrb[0].mxu0
        %1526 = vmatprep.mubr.bf16.mxu0 0
        %1527 = vmatmul.mubr.bf16.gmra.mrb[0].mxu0 %v1417
        %v1528 = vpop.f32.mrb[0].mxu0
        %v1529 = vadd.f32 %v1355, %v1528
        %v1530 = vpop.f32.mrb[0].mxu0
        %v1531 = vpop.f32.mrb[0].mxu0
        %v1532 = vadd.f32 %v1355, %v1531
        %v1533 = vpop.f32.mrb[0].mxu0
        %1534 = vmatprep.mubr.bf16.mxu0 0
        %1535 = vmatmul.mubr.bf16.gmra.mrb[0].mxu0 %v1420
        %v1536 = vpop.f32.mrb[0].mxu0
        %v1537 = vadd.f32 %v1355, %v1536
        %v1538 = vpop.f32.mrb[0].mxu0
        %v1539 = vpop.f32.mrb[0].mxu0
        %v1540 = vadd.f32 %v1355, %v1539
        %v1541 = vpop.f32.mrb[0].mxu0
        %1542 = vdwg.mxu0
        %1543 = vst [vmem:[%s274] sm:$0xff] %v1481
        %1544 = vst [vmem:[%s274 + $0x8] sm:$0xff] %v1484
        %1545 = vst [vmem:[%s274 + $0x10] sm:$0xff] %v1489
        %1546 = vst [vmem:[%s274 + $0x18] sm:$0xff] %v1492
        %1547 = vst [vmem:[%s274 + $0x20] sm:$0xff] %v1497
        %1548 = vst [vmem:[%s274 + $0x28] sm:$0xff] %v1500
        %1549 = vst [vmem:[%s274 + $0x30] sm:$0xff] %v1505
        %1550 = vst [vmem:[%s274 + $0x38] sm:$0xff] %v1508
        %1551 = vst [vmem:[%s274 + $0x40] sm:$0xff] %v1513
        %1552 = vst [vmem:[%s274 + $0x48] sm:$0xff] %v1516
        %1553 = vst [vmem:[%s274 + $0x50] sm:$0xff] %v1521
        %1554 = vst [vmem:[%s274 + $0x58] sm:$0xff] %v1524
        %1555 = vst [vmem:[%s274 + $0x60] sm:$0xff] %v1529
        %1556 = vst [vmem:[%s274 + $0x68] sm:$0xff] %v1532
        %1557 = vst [vmem:[%s274 + $0x70] sm:$0xff] %v1537
        %1558 = vst [vmem:[%s274 + $0x78] sm:$0xff] %v1540
        %s1559 = sand.u32 %s181, 1
        %s1560 = scalar_lea.sflag [#allocation3], %s1559
        %s1561 = sand.u32 %s181, 1
        %s1562 = smul.addr %s1561, 128
        %s1563 = scalar_lea.vmem [#allocation2], %s1562
        // Predicated region
        $region49: #{tpu_custom_call.1} parent=47 // pred_check
          %p1564 = pneg %p191
        $region50: #{tpu_custom_call.1} parent=47 // pred_check_branch
          %1566 = sbr.rel (%p1564) target = $region52
        $region51: #{tpu_custom_call.1} parent=47 // pred_region
          %s1567 = smul.u32 16, %s21
          %s1569 = ssub.s32 2048, 2048
          %1570 = vsyncadd %s1560, %s1569
          %s1571 = smul.addr %s1567, 128
          %s1572 = scalar_lea.hbm %s7, %s1571
          %s1573 = sshll.u32 %s1563, 4
          %s1574 = int_to_ptr.vmem [resolvable:$true] %s1573
          %1579 = dma.vmem_to_hbm [thread:$0]  %s1574, 2048, %s1572, %s1560, 128, 128, 8
        $region52: #{tpu_custom_call.1} parent=47 // pred_fallthru
          _
      $region48: #{tpu_custom_call.1} parent=5 // pred_fallthru
        _
      %p1580 = scmp.le.s32.totalorder 2, %s16
      // Predicated region
      $region53: #{tpu_custom_call.1} parent=5 // pred_check
        %p1581 = pneg %p1580
      $region54: #{tpu_custom_call.1} parent=5 // pred_check_branch
        %1583 = sbr.rel (%p1581) target = $region56
      $region55: #{tpu_custom_call.1} parent=5 // pred_region
        %s1584 = ssub.s32 %s16, 2
        // Predicated region
        $region57: #{tpu_custom_call.1} parent=55 // pred_check
          %p1585 = pneg %p197
        $region58: #{tpu_custom_call.1} parent=55 // pred_check_branch
          %1587 = sbr.rel (%p1585) target = $region60
        $region59: #{tpu_custom_call.1} parent=55 // pred_region
          %s1588 = sand.u32 %s182, 1
          %s1589 = scalar_lea.sflag [#allocation3], %s1588
          %s1590 = sand.u32 %s182, 1
          %s1591 = smul.addr %s1590, 128
          %s1592 = scalar_lea.vmem [#allocation2], %s1591
          %1593 = dma.done %s1589, 2048
        $region60: #{tpu_custom_call.1} parent=55 // pred_fallthru
          _
      $region56: #{tpu_custom_call.1} parent=5 // pred_fallthru
        _
    $region6: #{tpu_custom_call.1} parent=1 // loop_footer
      %s20 = sadd.s32 1, %s16
    $region7: #{tpu_custom_call.1} parent=1 // loop_footer_branch
      %15 = sbr.rel target = $region3
    $region8: #{tpu_custom_call.1} parent=1 // loop_exit
      _
    %1594 = vsyncpa [#allocation3], 1
    %s1595 = scalar_lea.sflag [#allocation3], 1
    %1596 = vsyncpa %s1595, 1

</llo_original>
